<compile_context>
chip_gen: v6e
topology: v6e:2x2x1
jax: 0.10.0
libtpu: 0.0.40
codegen_flags: <defaults>
</compile_context>

<pallas_src>
import functools

import jax
import jax.numpy as jnp
from jax.experimental import pallas as pl
from jax.experimental.pallas import tpu as pltpu


_STATS_W = 128          # lane-dense width of the packed [enc, rel, cos, gamma] output
_SLAB_ROWS = 32         # rows in the packed small-constant slab (>= 27, multiple of 8)


# ----------------------------------------------------------------------------
# The fused forward kernel
# ----------------------------------------------------------------------------
def _dagmm_kernel(x_ref,
                  ew1, ew2, ew3, ew4,
                  dw1, dw2, dw3, dw4,
                  cs_ref,
                  dec_ref, stats_ref,
                  *, n_gmm):
    f32 = jnp.float32
    bf16 = jnp.bfloat16

    x = x_ref[...]                                           # (BN, Dx) f32

    # ---------------- encoder: 4 folded conv layers (+tanh) ----------------
    # Packed-constant slab layout (rows):
    #   0..3  enc biases        4..7  dec biases
    #   8 e_lin_w   9 d_lin_w   10 d_lin_b   11 e_lin_b
    #   12 est_b1   13 est_b2   14..16 est_w1 (3x10)   17..26 est_w2 (10xn_gmm)
    h = x
    for l, w_ref in enumerate((ew1, ew2, ew3, ew4)):
        wm = w_ref[...]                                      # (Din, Dout) bf16
        b = cs_ref[l:l + 1, : wm.shape[1]]                   # (1, Dout) f32
        acc = jnp.dot(h.astype(bf16), wm, preferred_element_type=f32) + b
        h = jnp.tanh(acc)

    # Flatten + Linear(feat -> 1): lane reduce on the VPU/XLU (output width 1).
    feat = ew4.shape[1]
    elw = cs_ref[8:9, :feat]
    elb = cs_ref[11:12, 0:1]
    enc = jnp.sum(h * elw, axis=1, keepdims=True) + elb      # (BN, 1)

    # ---------------- decoder ----------------
    dlw = cs_ref[9:10, :feat]
    dlb = cs_ref[10:11, :feat]
    d = enc * dlw + dlb                                      # Linear(1 -> feat)
    for l, (w_ref, act) in enumerate(((dw1, True), (dw2, True),
                                      (dw3, True), (dw4, False))):
        wm = w_ref[...]
        b = cs_ref[4 + l:5 + l, : wm.shape[1]]
        acc = jnp.dot(d.astype(bf16), wm, preferred_element_type=f32) + b
        d = jnp.tanh(acc) if act else acc
    dec_ref[...] = d.astype(dec_ref.dtype)                   # lane-dense store

    # ---------------- reconstruction statistics (f32) ----------------
    eps = 1e-8
    x2 = jnp.sum(x * x, axis=1, keepdims=True)
    d2 = jnp.sum(d * d, axis=1, keepdims=True)
    xd = jnp.sum(x * d, axis=1, keepdims=True)
    x_norm = jnp.sqrt(x2)
    d_norm = jnp.sqrt(d2)
    # torch F.cosine_similarity clamps each norm separately with eps=1e-8.
    cos = xd / (jnp.maximum(x_norm, eps) * jnp.maximum(d_norm, eps))
    # ||x - d||^2 = ||x||^2 - 2<x,d> + ||d||^2 (clamped against rounding).
    rel = jnp.sqrt(jnp.maximum(x2 - 2.0 * xd + d2, 0.0)) / x_norm  # torch parity: no eps

    # ---------------- estimation MLP ----------------
    w1 = cs_ref[14:17, 0:10]                                 # (3, 10)
    b1 = cs_ref[12:13, 0:10]
    h1 = jnp.tanh(b1 + enc * w1[0:1, :] + rel * w1[1:2, :] + cos * w1[2:3, :])
    # Dropout(p=0.5) is identity in eval mode.
    w2 = cs_ref[17:27, 0:n_gmm]                              # (10, n_gmm)
    b2 = cs_ref[13:14, 0:n_gmm]
    logits = jnp.dot(h1, w2, preferred_element_type=f32) + b2
    m = jnp.max(logits, axis=1, keepdims=True)
    e = jnp.exp(logits - m)
    gamma = e / jnp.sum(e, axis=1, keepdims=True)            # exact normalization

    # Single lane-dense packed output: [enc | rel | cos | gamma | 0-pad].
    bn = x.shape[0]
    pad = jnp.zeros((bn, stats_ref.shape[1] - 3 - n_gmm), f32)
    stats_ref[...] = jnp.concatenate([enc, rel, cos, gamma, pad], axis=1)


# ----------------------------------------------------------------------------
# Parameter initialization (torch layouts) and one-time weight folding
# ----------------------------------------------------------------------------
def init_params(key, in_channel=3, fSize=4, imSize=16, n_gmm=2, latent_dim=3):
    inSize = imSize // 2 ** 4
    keys = iter(jax.random.split(key, 40))

    def u(shape, fan_in):
        bound = 1.0 / (fan_in ** 0.5)
        return jax.random.uniform(next(keys), shape, jnp.float32, -bound, bound)

    p = {}
    enc_chans = [in_channel, fSize, fSize * 2, fSize * 4, fSize * 8]
    for l in range(4):
        cin, cout = enc_chans[l], enc_chans[l + 1]
        p[f"e_conv{l+1}_w"] = u((cout, cin, 5, 5), cin * 25)
        p[f"e_conv{l+1}_b"] = u((cout,), cin * 25)
    feat = fSize * 8 * inSize * inSize
    p["e_lin_w"] = u((1, feat), feat)          # torch Linear layout (out, in)
    p["e_lin_b"] = u((1,), feat)
    p["d_lin_w"] = u((feat, 1), 1)
    p["d_lin_b"] = u((feat,), 1)
    dec_chans = [fSize * 8, fSize * 4, fSize * 2, fSize, 3]
    for l in range(4):
        cin, cout = dec_chans[l], dec_chans[l + 1]
        p[f"d_convt{l+1}_w"] = u((cin, cout, 3, 3), cin * 9)  # torch ConvT layout
        p[f"d_convt{l+1}_b"] = u((cout,), cin * 9)
    p["est_lin1_w"] = u((10, latent_dim), latent_dim)
    p["est_lin1_b"] = u((10,), latent_dim)
    p["est_lin2_w"] = u((n_gmm, 10), 10)
    p["est_lin2_b"] = u((n_gmm,), 10)
    p["_meta"] = dict(in_channel=in_channel, fSize=fSize, imSize=imSize,
                      inSize=inSize, n_gmm=n_gmm, latent_dim=latent_dim)
    return p


def _conv_dense(w, H, W, stride, pad):
    """Fold a Conv2d(stride, pad) into a dense (Cin*H*W, Cout*Ho*Wo) matrix."""
    Cout, Cin, kh, kw = w.shape
    Din = Cin * H * W
    basis = jnp.eye(Din, dtype=jnp.float32).reshape(Din, Cin, H, W)
    out = jax.lax.conv_general_dilated(
        basis, w.astype(jnp.float32),
        window_strides=(stride, stride),
        padding=((pad, pad), (pad, pad)),
        dimension_numbers=("NCHW", "OIHW", "NCHW"))
    Ho, Wo = out.shape[2], out.shape[3]
    return out.reshape(Din, -1), Ho, Wo


def _convT_dense(w, H, W, stride, pad, out_pad):
    """Fold a ConvTranspose2d into a dense (Cin*H*W, Cout*Ho*Wo) matrix."""
    Cin, Cout, kh, kw = w.shape
    Din = Cin * H * W
    basis = jnp.eye(Din, dtype=jnp.float32).reshape(Din, Cin, H, W)
    w_conv = jnp.flip(w, axis=(-2, -1)).transpose(1, 0, 2, 3)  # (Cout,Cin,kh,kw)
    out = jax.lax.conv_general_dilated(
        basis, w_conv.astype(jnp.float32),
        window_strides=(1, 1),
        padding=((kh - 1 - pad, kh - 1 - pad + out_pad),
                 (kw - 1 - pad, kw - 1 - pad + out_pad)),
        lhs_dilation=(stride, stride),
        dimension_numbers=("NCHW", "OIHW", "NCHW"))
    Ho, Wo = out.shape[2], out.shape[3]
    return out.reshape(Din, -1), Ho, Wo


def prepare_params(params):
    """One-time weight repacking: fold convs to dense bf16 matmul operands,
    and pack every small constant (biases, tiny linears, estimation MLP) into
    one lane-/sublane-aligned f32 slab.  Runs once outside the forward path."""
    p = params
    meta = p["_meta"]
    fSize, imSize, inSize = meta["fSize"], meta["imSize"], meta["inSize"]
    n_gmm = meta["n_gmm"]
    assert meta["latent_dim"] == 3, "DAGMM z = [enc, rel_euclid, cos] has width 3"

    prep = {"_meta": dict(meta)}

    enc_ws, enc_bs = [], []
    H = W = imSize
    for l in range(1, 5):
        w, b = p[f"e_conv{l}_w"], p[f"e_conv{l}_b"]
        Wm, Ho, Wo = _conv_dense(w, H, W, 2, 2)
        enc_ws.append(Wm.astype(jnp.bfloat16))
        enc_bs.append(jnp.repeat(b, Ho * Wo).astype(jnp.float32))
        H, W = Ho, Wo

    feat = fSize * 8 * inSize * inSize

    dec_ws, dec_bs = [], []
    H = W = inSize
    for l in range(1, 5):
        w, b = p[f"d_convt{l}_w"], p[f"d_convt{l}_b"]
        Wm, Ho, Wo = _convT_dense(w, H, W, 2, 1, 1)
        dec_ws.append(Wm.astype(jnp.bfloat16))
        dec_bs.append(jnp.repeat(b, Ho * Wo).astype(jnp.float32))
        H, W = Ho, Wo

    # --- packed small-constant slab (see kernel docstring for row layout) ---
    rows = {}
    for l in range(4):
        rows[l] = enc_bs[l]
        rows[4 + l] = dec_bs[l]
    rows[8] = p["e_lin_w"].reshape(feat)
    rows[9] = p["d_lin_w"].reshape(feat)
    rows[10] = p["d_lin_b"].reshape(feat)
    rows[11] = p["e_lin_b"].reshape(1)
    rows[12] = p["est_lin1_b"].reshape(10)
    rows[13] = p["est_lin2_b"].reshape(n_gmm)
    w1t = p["est_lin1_w"].T                   # (3, 10)
    for r in range(3):
        rows[14 + r] = w1t[r]
    w2t = p["est_lin2_w"].T                   # (10, n_gmm)
    for r in range(10):
        rows[17 + r] = w2t[r]

    width = max(int(v.shape[0]) for v in rows.values())
    width = max(128, ((width + 127) // 128) * 128)
    slab = jnp.zeros((_SLAB_ROWS, width), jnp.float32)
    for r, v in rows.items():
        slab = slab.at[r, : v.shape[0]].set(v.astype(jnp.float32))

    prep["enc_ws"] = enc_ws
    prep["dec_ws"] = dec_ws
    prep["consts"] = slab
    return prep


# ----------------------------------------------------------------------------
# Forward wrapper: one pallas_call, batch-parallel grid
# ----------------------------------------------------------------------------
def _choose_tiling(n):
    """Pick (BN, padded_N): BN multiple of 8, <=1024, >=2 grid steps when the
    batch allows it (so v7x's two TensorCores both get work)."""
    n8 = ((n + 7) // 8) * 8
    if n8 <= 16:
        return n8, n8                  # tiny batch: single aligned tile
    bn = 8
    for cand in (1024, 512, 256, 128, 64, 32, 16, 8):
        if -(-n8 // cand) >= 2:
            bn = cand
            break
    n_pad = -(-n8 // bn) * bn
    return bn, n_pad


def dagmm_forward(prepared, x):
    meta = prepared["_meta"]
    N = x.shape[0]
    in_channel, imSize = meta["in_channel"], meta["imSize"]
    n_gmm = meta["n_gmm"]
    Dx = in_channel * imSize * imSize

    x_flat = x.reshape(N, Dx).astype(jnp.float32)   # NCHW-flat (matches torch .view)
    BN, n_pad = _choose_tiling(N)
    if n_pad != N:
        # Pad with edge rows (finite statistics); padded rows are sliced off.
        x_flat = jnp.pad(x_flat, ((0, n_pad - N), (0, 0)), mode="edge")

    weights = list(prepared["enc_ws"]) + list(prepared["dec_ws"])
    cs = prepared["consts"]

    in_specs = (
        [pl.BlockSpec((BN, Dx), lambda i: (i, 0))]
        + [pl.BlockSpec(w.shape, lambda i: (0, 0)) for w in weights]
        + [pl.BlockSpec(cs.shape, lambda i: (0, 0))]
    )
    out_specs = (
        pl.BlockSpec((BN, Dx), lambda i: (i, 0)),
        pl.BlockSpec((BN, _STATS_W), lambda i: (i, 0)),
    )

    dec_flat, stats = pl.pallas_call(
        functools.partial(_dagmm_kernel, n_gmm=n_gmm),
        out_shape=(
            jax.ShapeDtypeStruct((n_pad, Dx), jnp.float32),
            jax.ShapeDtypeStruct((n_pad, _STATS_W), jnp.float32),
        ),
        grid=(n_pad // BN,),
        in_specs=in_specs,
        out_specs=out_specs,
        compiler_params=pltpu.CompilerParams(
            dimension_semantics=("parallel",),
            vmem_limit_bytes=48 * 1024 * 1024,
        ),
    )(x_flat, *weights, cs)

    dec = dec_flat[:N].reshape(N, in_channel, imSize, imSize)
    stats = stats[:N]
    enc = stats[:, 0:1]
    z = stats[:, 0:3]
    gamma = stats[:, 3:3 + n_gmm]
    return enc, dec, z, gamma


# ----------------------------------------------------------------------------
# Plain-JAX f32 reference (for in-script verification only)
# ----------------------------------------------------------------------------
def _reference_forward(params, x):
    p = params
    meta = p["_meta"]
    N = x.shape[0]
    fSize, inSize = meta["fSize"], meta["inSize"]

    def conv(h, w, b, stride, pad):
        out = jax.lax.conv_general_dilated(
            h, w, (stride, stride), ((pad, pad), (pad, pad)),
            dimension_numbers=("NCHW", "OIHW", "NCHW"))
        return out + b.reshape(1, -1, 1, 1)

    def convT(h, w, b, stride, pad, out_pad):
        kh, kw = w.shape[2], w.shape[3]
        w_conv = jnp.flip(w, axis=(-2, -1)).transpose(1, 0, 2, 3)
        out = jax.lax.conv_general_dilated(
            h, w_conv, (1, 1),
            ((kh - 1 - pad, kh - 1 - pad + out_pad),
             (kw - 1 - pad, kw - 1 - pad + out_pad)),
            lhs_dilation=(stride, stride),
            dimension_numbers=("NCHW", "OIHW", "NCHW"))
        return out + b.reshape(1, -1, 1, 1)

    h = x
    for l in range(1, 5):
        h = jnp.tanh(conv(h, p[f"e_conv{l}_w"], p[f"e_conv{l}_b"], 2, 2))
    enc = h.reshape(N, -1) @ p["e_lin_w"].T + p["e_lin_b"]
    d = enc @ p["d_lin_w"].T + p["d_lin_b"]
    d = d.reshape(N, fSize * 8, inSize, inSize)
    for l in range(1, 4):
        d = jnp.tanh(convT(d, p[f"d_convt{l}_w"], p[f"d_convt{l}_b"], 2, 1, 1))
    dec = convT(d, p["d_convt4_w"], p["d_convt4_b"], 2, 1, 1)

    fx, fd = x.reshape(N, -1), dec.reshape(N, -1)
    eps = 1e-8
    xn = jnp.linalg.norm(fx, axis=1, keepdims=True)
    dn = jnp.linalg.norm(fd, axis=1, keepdims=True)
    cos = jnp.sum(fx * fd, axis=1, keepdims=True) / (
        jnp.maximum(xn, eps) * jnp.maximum(dn, eps))
    rel = jnp.linalg.norm(fx - fd, axis=1, keepdims=True) / xn
    z = jnp.concatenate([enc, rel, cos], axis=1)
    h1 = jnp.tanh(z @ p["est_lin1_w"].T + p["est_lin1_b"])
    logits = h1 @ p["est_lin2_w"].T + p["est_lin2_b"]
    gamma = jax.nn.softmax(logits, axis=1)
    return enc, dec, z, gamma


if __name__ == "__main__":
    key = jax.random.PRNGKey(0)
    k_param, k_x = jax.random.split(key)

    in_channel, fSize, imSize = 3, 4, 16        # imSize // 2**4 == 1
    params = init_params(k_param, in_channel=in_channel, fSize=fSize, imSize=imSize)
    prepared = prepare_params(params)           # one-time weight folding + packing

    x = jax.random.normal(k_x, (2, in_channel, imSize, imSize), jnp.float32)

    enc, dec, z, gamma = dagmm_forward(prepared, x)
    jax.block_until_ready((enc, dec, z, gamma))

    assert enc.shape == (2, 1)
    assert dec.shape == (2, in_channel, imSize, imSize)
    assert z.shape == (2, 3)
    assert gamma.shape == (2, 2)

    # Verify against a plain-JAX f32 reference (bf16 matmuls in the kernel ->
    # loose tolerance).
    enc_r, dec_r, z_r, gamma_r = _reference_forward(params, x)
    for name, got, want in (("enc", enc, enc_r), ("dec", dec, dec_r),
                            ("z", z, z_r), ("gamma", gamma, gamma_r)):
        err = float(jnp.max(jnp.abs(got - want)))
        assert jnp.allclose(got, want, rtol=1e-1, atol=1e-1), \
            f"{name} mismatch (max abs err {err:.4f})"

    print("KERNEL_OK")
</pallas_src>

<mosaic_0001>
module attributes {stable_mosaic.version = 11 : i64} {
  func.func @_dagmm_kernel(%arg0: i32, %arg1: memref<8x768xf32, #tpu.memory_space<vmem>>, %arg2: memref<768x256xbf16, #tpu.memory_space<vmem>>, %arg3: memref<256x128xbf16, #tpu.memory_space<vmem>>, %arg4: memref<128x64xbf16, #tpu.memory_space<vmem>>, %arg5: memref<64x32xbf16, #tpu.memory_space<vmem>>, %arg6: memref<32x64xbf16, #tpu.memory_space<vmem>>, %arg7: memref<64x128xbf16, #tpu.memory_space<vmem>>, %arg8: memref<128x256xbf16, #tpu.memory_space<vmem>>, %arg9: memref<256x768xbf16, #tpu.memory_space<vmem>>, %arg10: memref<32x768xf32, #tpu.memory_space<vmem>>, %arg11: memref<8x768xf32, #tpu.memory_space<vmem>>, %arg12: memref<8x128xf32, #tpu.memory_space<vmem>>) attributes {dimension_semantics = [#tpu.dimension_semantics<parallel>], iteration_bounds = array<i64: 1>, scalar_prefetch = 0 : i64, scratch_operands = 0 : i64, tpu.core_type = #tpu.core_type<tc>, window_params = [{transform_indices = @transform_0, window_bounds = array<i64: 8, 768>}, {pipeline_mode = #tpu.pipeline_mode<synchronous>, transform_indices = @transform_1, window_bounds = array<i64: 768, 256>}, {pipeline_mode = #tpu.pipeline_mode<synchronous>, transform_indices = @transform_2, window_bounds = array<i64: 256, 128>}, {pipeline_mode = #tpu.pipeline_mode<synchronous>, transform_indices = @transform_3, window_bounds = array<i64: 128, 64>}, {pipeline_mode = #tpu.pipeline_mode<synchronous>, transform_indices = @transform_4, window_bounds = array<i64: 64, 32>}, {pipeline_mode = #tpu.pipeline_mode<synchronous>, transform_indices = @transform_5, window_bounds = array<i64: 32, 64>}, {pipeline_mode = #tpu.pipeline_mode<synchronous>, transform_indices = @transform_6, window_bounds = array<i64: 64, 128>}, {pipeline_mode = #tpu.pipeline_mode<synchronous>, transform_indices = @transform_7, window_bounds = array<i64: 128, 256>}, {pipeline_mode = #tpu.pipeline_mode<synchronous>, transform_indices = @transform_8, window_bounds = array<i64: 256, 768>}, {pipeline_mode = #tpu.pipeline_mode<synchronous>, transform_indices = @transform_9, window_bounds = array<i64: 32, 768>}, {transform_indices = @transform_10, window_bounds = array<i64: 8, 768>}, {transform_indices = @transform_11, window_bounds = array<i64: 8, 128>}]} {
    %c0 = arith.constant 0 : index
    %c0_0 = arith.constant 0 : index
    %0 = vector.load %arg1[%c0, %c0_0] : memref<8x768xf32, #tpu.memory_space<vmem>>, vector<8x768xf32>
    %c0_1 = arith.constant 0 : index
    %c0_2 = arith.constant 0 : index
    %1 = vector.load %arg2[%c0_1, %c0_2] : memref<768x256xbf16, #tpu.memory_space<vmem>>, vector<768x256xbf16>
    %c0_3 = arith.constant 0 : index
    %c0_4 = arith.constant 0 : index
    %2 = vector.load %arg10[%c0_3, %c0_4] : memref<32x768xf32, #tpu.memory_space<vmem>>, vector<1x256xf32>
    %3 = arith.truncf %0 : vector<8x768xf32> to vector<8x768xbf16>
    %cst = arith.constant dense<0.000000e+00> : vector<8x256xf32>
    %4 = tpu.matmul %3, %1, %cst {dimension_numbers = #tpu.dot_dimension_numbers<[1], [0], [0], [1], [0, 0, 1, 1], [], []>} : vector<8x768xbf16>, vector<768x256xbf16>, vector<8x256xf32> -> vector<8x256xf32>
    %5 = vector.broadcast %2 : vector<1x256xf32> to vector<8x256xf32>
    %6 = arith.addf %4, %5 : vector<8x256xf32>
    %7 = math.tanh %6 : vector<8x256xf32>
    %c0_5 = arith.constant 0 : index
    %c0_6 = arith.constant 0 : index
    %8 = vector.load %arg3[%c0_5, %c0_6] : memref<256x128xbf16, #tpu.memory_space<vmem>>, vector<256x128xbf16>
    %c1 = arith.constant 1 : index
    %c0_7 = arith.constant 0 : index
    %9 = vector.load %arg10[%c1, %c0_7] : memref<32x768xf32, #tpu.memory_space<vmem>>, vector<1x128xf32>
    %10 = arith.truncf %7 : vector<8x256xf32> to vector<8x256xbf16>
    %cst_8 = arith.constant dense<0.000000e+00> : vector<8x128xf32>
    %11 = tpu.matmul %10, %8, %cst_8 {dimension_numbers = #tpu.dot_dimension_numbers<[1], [0], [0], [1], [0, 0, 1, 1], [], []>} : vector<8x256xbf16>, vector<256x128xbf16>, vector<8x128xf32> -> vector<8x128xf32>
    %12 = vector.broadcast %9 : vector<1x128xf32> to vector<8x128xf32>
    %13 = arith.addf %11, %12 : vector<8x128xf32>
    %14 = math.tanh %13 : vector<8x128xf32>
    %c0_9 = arith.constant 0 : index
    %c0_10 = arith.constant 0 : index
    %15 = vector.load %arg4[%c0_9, %c0_10] : memref<128x64xbf16, #tpu.memory_space<vmem>>, vector<128x64xbf16>
    %c2 = arith.constant 2 : index
    %c0_11 = arith.constant 0 : index
    %16 = vector.load %arg10[%c2, %c0_11] : memref<32x768xf32, #tpu.memory_space<vmem>>, vector<1x64xf32>
    %17 = arith.truncf %14 : vector<8x128xf32> to vector<8x128xbf16>
    %cst_12 = arith.constant dense<0.000000e+00> : vector<8x64xf32>
    %18 = tpu.matmul %17, %15, %cst_12 {dimension_numbers = #tpu.dot_dimension_numbers<[1], [0], [0], [1], [0, 0, 1, 1], [], []>} : vector<8x128xbf16>, vector<128x64xbf16>, vector<8x64xf32> -> vector<8x64xf32>
    %19 = vector.broadcast %16 : vector<1x64xf32> to vector<8x64xf32>
    %20 = arith.addf %18, %19 : vector<8x64xf32>
    %21 = math.tanh %20 : vector<8x64xf32>
    %c0_13 = arith.constant 0 : index
    %c0_14 = arith.constant 0 : index
    %22 = vector.load %arg5[%c0_13, %c0_14] : memref<64x32xbf16, #tpu.memory_space<vmem>>, vector<64x32xbf16>
    %c3 = arith.constant 3 : index
    %c0_15 = arith.constant 0 : index
    %23 = vector.load %arg10[%c3, %c0_15] : memref<32x768xf32, #tpu.memory_space<vmem>>, vector<1x32xf32>
    %24 = arith.truncf %21 : vector<8x64xf32> to vector<8x64xbf16>
    %cst_16 = arith.constant dense<0.000000e+00> : vector<8x32xf32>
    %25 = tpu.matmul %24, %22, %cst_16 {dimension_numbers = #tpu.dot_dimension_numbers<[1], [0], [0], [1], [0, 0, 1, 1], [], []>} : vector<8x64xbf16>, vector<64x32xbf16>, vector<8x32xf32> -> vector<8x32xf32>
    %26 = vector.broadcast %23 : vector<1x32xf32> to vector<8x32xf32>
    %27 = arith.addf %25, %26 : vector<8x32xf32>
    %28 = math.tanh %27 : vector<8x32xf32>
    %c8 = arith.constant 8 : index
    %c0_17 = arith.constant 0 : index
    %29 = vector.load %arg10[%c8, %c0_17] : memref<32x768xf32, #tpu.memory_space<vmem>>, vector<1x32xf32>
    %c11 = arith.constant 11 : index
    %c0_18 = arith.constant 0 : index
    %30 = vector.load %arg10[%c11, %c0_18] : memref<32x768xf32, #tpu.memory_space<vmem>>, vector<1x1xf32>
    %31 = vector.broadcast %29 : vector<1x32xf32> to vector<8x32xf32>
    %32 = arith.mulf %28, %31 : vector<8x32xf32>
    %cst_19 = arith.constant dense<0.000000e+00> : vector<8xf32>
    %33 = vector.multi_reduction <add>, %32, %cst_19 [1] : vector<8x32xf32> to vector<8xf32>
    %34 = vector.shape_cast %33 : vector<8xf32> to vector<8x1xf32>
    %35 = vector.broadcast %30 : vector<1x1xf32> to vector<8x1xf32>
    %36 = arith.addf %34, %35 : vector<8x1xf32>
    %c9 = arith.constant 9 : index
    %c0_20 = arith.constant 0 : index
    %37 = vector.load %arg10[%c9, %c0_20] : memref<32x768xf32, #tpu.memory_space<vmem>>, vector<1x32xf32>
    %c10 = arith.constant 10 : index
    %c0_21 = arith.constant 0 : index
    %38 = vector.load %arg10[%c10, %c0_21] : memref<32x768xf32, #tpu.memory_space<vmem>>, vector<1x32xf32>
    %39 = vector.broadcast %36 : vector<8x1xf32> to vector<8x32xf32>
    %40 = vector.broadcast %37 : vector<1x32xf32> to vector<8x32xf32>
    %41 = arith.mulf %39, %40 : vector<8x32xf32>
    %42 = vector.broadcast %38 : vector<1x32xf32> to vector<8x32xf32>
    %43 = arith.addf %41, %42 : vector<8x32xf32>
    %c0_22 = arith.constant 0 : index
    %c0_23 = arith.constant 0 : index
    %44 = vector.load %arg6[%c0_22, %c0_23] : memref<32x64xbf16, #tpu.memory_space<vmem>>, vector<32x64xbf16>
    %c4 = arith.constant 4 : index
    %c0_24 = arith.constant 0 : index
    %45 = vector.load %arg10[%c4, %c0_24] : memref<32x768xf32, #tpu.memory_space<vmem>>, vector<1x64xf32>
    %46 = arith.truncf %43 : vector<8x32xf32> to vector<8x32xbf16>
    %cst_25 = arith.constant dense<0.000000e+00> : vector<8x64xf32>
    %47 = tpu.matmul %46, %44, %cst_25 {dimension_numbers = #tpu.dot_dimension_numbers<[1], [0], [0], [1], [0, 0, 1, 1], [], []>} : vector<8x32xbf16>, vector<32x64xbf16>, vector<8x64xf32> -> vector<8x64xf32>
    %48 = vector.broadcast %45 : vector<1x64xf32> to vector<8x64xf32>
    %49 = arith.addf %47, %48 : vector<8x64xf32>
    %50 = math.tanh %49 : vector<8x64xf32>
    %c0_26 = arith.constant 0 : index
    %c0_27 = arith.constant 0 : index
    %51 = vector.load %arg7[%c0_26, %c0_27] : memref<64x128xbf16, #tpu.memory_space<vmem>>, vector<64x128xbf16>
    %c5 = arith.constant 5 : index
    %c0_28 = arith.constant 0 : index
    %52 = vector.load %arg10[%c5, %c0_28] : memref<32x768xf32, #tpu.memory_space<vmem>>, vector<1x128xf32>
    %53 = arith.truncf %50 : vector<8x64xf32> to vector<8x64xbf16>
    %cst_29 = arith.constant dense<0.000000e+00> : vector<8x128xf32>
    %54 = tpu.matmul %53, %51, %cst_29 {dimension_numbers = #tpu.dot_dimension_numbers<[1], [0], [0], [1], [0, 0, 1, 1], [], []>} : vector<8x64xbf16>, vector<64x128xbf16>, vector<8x128xf32> -> vector<8x128xf32>
    %55 = vector.broadcast %52 : vector<1x128xf32> to vector<8x128xf32>
    %56 = arith.addf %54, %55 : vector<8x128xf32>
    %57 = math.tanh %56 : vector<8x128xf32>
    %c0_30 = arith.constant 0 : index
    %c0_31 = arith.constant 0 : index
    %58 = vector.load %arg8[%c0_30, %c0_31] : memref<128x256xbf16, #tpu.memory_space<vmem>>, vector<128x256xbf16>
    %c6 = arith.constant 6 : index
    %c0_32 = arith.constant 0 : index
    %59 = vector.load %arg10[%c6, %c0_32] : memref<32x768xf32, #tpu.memory_space<vmem>>, vector<1x256xf32>
    %60 = arith.truncf %57 : vector<8x128xf32> to vector<8x128xbf16>
    %cst_33 = arith.constant dense<0.000000e+00> : vector<8x256xf32>
    %61 = tpu.matmul %60, %58, %cst_33 {dimension_numbers = #tpu.dot_dimension_numbers<[1], [0], [0], [1], [0, 0, 1, 1], [], []>} : vector<8x128xbf16>, vector<128x256xbf16>, vector<8x256xf32> -> vector<8x256xf32>
    %62 = vector.broadcast %59 : vector<1x256xf32> to vector<8x256xf32>
    %63 = arith.addf %61, %62 : vector<8x256xf32>
    %64 = math.tanh %63 : vector<8x256xf32>
    %c0_34 = arith.constant 0 : index
    %c0_35 = arith.constant 0 : index
    %65 = vector.load %arg9[%c0_34, %c0_35] : memref<256x768xbf16, #tpu.memory_space<vmem>>, vector<256x768xbf16>
    %c7 = arith.constant 7 : index
    %c0_36 = arith.constant 0 : index
    %66 = vector.load %arg10[%c7, %c0_36] : memref<32x768xf32, #tpu.memory_space<vmem>>, vector<1x768xf32>
    %67 = arith.truncf %64 : vector<8x256xf32> to vector<8x256xbf16>
    %cst_37 = arith.constant dense<0.000000e+00> : vector<8x768xf32>
    %68 = tpu.matmul %67, %65, %cst_37 {dimension_numbers = #tpu.dot_dimension_numbers<[1], [0], [0], [1], [0, 0, 1, 1], [], []>} : vector<8x256xbf16>, vector<256x768xbf16>, vector<8x768xf32> -> vector<8x768xf32>
    %69 = vector.broadcast %66 : vector<1x768xf32> to vector<8x768xf32>
    %70 = arith.addf %68, %69 : vector<8x768xf32>
    %c0_38 = arith.constant 0 : index
    %c0_39 = arith.constant 0 : index
    %71 = vector.load %arg11[%c0_38, %c0_39] : memref<8x768xf32, #tpu.memory_space<vmem>>, vector<8x768xf32>
    tpu.vector_store %arg11[%c0_38, %c0_39], %70 {strides = array<i32>} : memref<8x768xf32, #tpu.memory_space<vmem>>, vector<8x768xf32>,
    %72 = arith.mulf %0, %0 : vector<8x768xf32>
    %cst_40 = arith.constant dense<0.000000e+00> : vector<8xf32>
    %73 = vector.multi_reduction <add>, %72, %cst_40 [1] : vector<8x768xf32> to vector<8xf32>
    %74 = vector.shape_cast %73 : vector<8xf32> to vector<8x1xf32>
    %75 = arith.mulf %70, %70 : vector<8x768xf32>
    %cst_41 = arith.constant dense<0.000000e+00> : vector<8xf32>
    %76 = vector.multi_reduction <add>, %75, %cst_41 [1] : vector<8x768xf32> to vector<8xf32>
    %77 = vector.shape_cast %76 : vector<8xf32> to vector<8x1xf32>
    %78 = arith.mulf %0, %70 : vector<8x768xf32>
    %cst_42 = arith.constant dense<0.000000e+00> : vector<8xf32>
    %79 = vector.multi_reduction <add>, %78, %cst_42 [1] : vector<8x768xf32> to vector<8xf32>
    %80 = vector.shape_cast %79 : vector<8xf32> to vector<8x1xf32>
    %81 = math.sqrt %74 : vector<8x1xf32>
    %82 = math.sqrt %77 : vector<8x1xf32>
    %cst_43 = arith.constant 9.99999993E-9 : f32
    %83 = vector.broadcast %cst_43 : f32 to vector<8x1xf32>
    %84 = arith.maximumf %81, %83 : vector<8x1xf32>
    %cst_44 = arith.constant 9.99999993E-9 : f32
    %85 = vector.broadcast %cst_44 : f32 to vector<8x1xf32>
    %86 = arith.maximumf %82, %85 : vector<8x1xf32>
    %87 = arith.mulf %84, %86 : vector<8x1xf32>
    %88 = arith.divf %80, %87 : vector<8x1xf32>
    %cst_45 = arith.constant 2.000000e+00 : f32
    %89 = vector.broadcast %cst_45 : f32 to vector<8x1xf32>
    %90 = arith.mulf %89, %80 : vector<8x1xf32>
    %91 = arith.subf %74, %90 : vector<8x1xf32>
    %92 = arith.addf %91, %77 : vector<8x1xf32>
    %cst_46 = arith.constant 0.000000e+00 : f32
    %93 = vector.broadcast %cst_46 : f32 to vector<8x1xf32>
    %94 = arith.maximumf %92, %93 : vector<8x1xf32>
    %95 = math.sqrt %94 : vector<8x1xf32>
    %96 = arith.divf %95, %81 : vector<8x1xf32>
    %c14 = arith.constant 14 : index
    %c0_47 = arith.constant 0 : index
    %97 = vector.load %arg10[%c14, %c0_47] : memref<32x768xf32, #tpu.memory_space<vmem>>, vector<3x10xf32>
    %c12 = arith.constant 12 : index
    %c0_48 = arith.constant 0 : index
    %98 = vector.load %arg10[%c12, %c0_48] : memref<32x768xf32, #tpu.memory_space<vmem>>, vector<1x10xf32>
    %99 = vector.extract_strided_slice %97 {offsets = [0, 0], sizes = [1, 10], strides = [1, 1]} : vector<3x10xf32> to vector<1x10xf32>
    %100 = vector.broadcast %36 : vector<8x1xf32> to vector<8x10xf32>
    %101 = vector.broadcast %99 : vector<1x10xf32> to vector<8x10xf32>
    %102 = arith.mulf %100, %101 : vector<8x10xf32>
    %103 = vector.broadcast %98 : vector<1x10xf32> to vector<8x10xf32>
    %104 = arith.addf %103, %102 : vector<8x10xf32>
    %105 = vector.extract_strided_slice %97 {offsets = [1, 0], sizes = [1, 10], strides = [1, 1]} : vector<3x10xf32> to vector<1x10xf32>
    %106 = vector.broadcast %96 : vector<8x1xf32> to vector<8x10xf32>
    %107 = vector.broadcast %105 : vector<1x10xf32> to vector<8x10xf32>
    %108 = arith.mulf %106, %107 : vector<8x10xf32>
    %109 = arith.addf %104, %108 : vector<8x10xf32>
    %110 = vector.extract_strided_slice %97 {offsets = [2, 0], sizes = [1, 10], strides = [1, 1]} : vector<3x10xf32> to vector<1x10xf32>
    %111 = vector.broadcast %88 : vector<8x1xf32> to vector<8x10xf32>
    %112 = vector.broadcast %110 : vector<1x10xf32> to vector<8x10xf32>
    %113 = arith.mulf %111, %112 : vector<8x10xf32>
    %114 = arith.addf %109, %113 : vector<8x10xf32>
    %115 = math.tanh %114 : vector<8x10xf32>
    %c17 = arith.constant 17 : index
    %c0_49 = arith.constant 0 : index
    %116 = vector.load %arg10[%c17, %c0_49] : memref<32x768xf32, #tpu.memory_space<vmem>>, vector<10x2xf32>
    %c13 = arith.constant 13 : index
    %c0_50 = arith.constant 0 : index
    %117 = vector.load %arg10[%c13, %c0_50] : memref<32x768xf32, #tpu.memory_space<vmem>>, vector<1x2xf32>
    %cst_51 = arith.constant dense<0.000000e+00> : vector<8x2xf32>
    %118 = tpu.matmul %115, %116, %cst_51 {dimension_numbers = #tpu.dot_dimension_numbers<[1], [0], [0], [1], [0, 0, 1, 1], [], []>} : vector<8x10xf32>, vector<10x2xf32>, vector<8x2xf32> -> vector<8x2xf32>
    %119 = vector.broadcast %117 : vector<1x2xf32> to vector<8x2xf32>
    %120 = arith.addf %118, %119 : vector<8x2xf32>
    %cst_52 = arith.constant dense<0xFF800000> : vector<8xf32>
    %121 = vector.multi_reduction <maximumf>, %120, %cst_52 [1] : vector<8x2xf32> to vector<8xf32>
    %122 = vector.shape_cast %121 : vector<8xf32> to vector<8x1xf32>
    %123 = vector.broadcast %122 : vector<8x1xf32> to vector<8x2xf32>
    %124 = arith.subf %120, %123 : vector<8x2xf32>
    %125 = math.exp %124 : vector<8x2xf32>
    %cst_53 = arith.constant dense<0.000000e+00> : vector<8xf32>
    %126 = vector.multi_reduction <add>, %125, %cst_53 [1] : vector<8x2xf32> to vector<8xf32>
    %127 = vector.shape_cast %126 : vector<8xf32> to vector<8x1xf32>
    %128 = vector.broadcast %127 : vector<8x1xf32> to vector<8x2xf32>
    %129 = arith.divf %125, %128 : vector<8x2xf32>
    %cst_54 = arith.constant 0.000000e+00 : f32
    %130 = vector.broadcast %cst_54 : f32 to vector<8x123xf32>
    %131 = tpu.concatenate %36, %96, %88, %129, %130 in 1 : vector<8x1xf32>, vector<8x1xf32>, vector<8x1xf32>, vector<8x2xf32>, vector<8x123xf32> -> vector<8x128xf32>
    %c0_55 = arith.constant 0 : index
    %c0_56 = arith.constant 0 : index
    %132 = vector.load %arg12[%c0_55, %c0_56] : memref<8x128xf32, #tpu.memory_space<vmem>>, vector<8x128xf32>
    tpu.vector_store %arg12[%c0_55, %c0_56], %131 {strides = array<i32>} : memref<8x128xf32, #tpu.memory_space<vmem>>, vector<8x128xf32>,
    return
  }
  func.func @transform_0(%arg0: i32) -> (i32, i32) {
    %c0_i32 = arith.constant 0 : i32
    %c0_i32_0 = arith.constant 0 : i32
    return %arg0, %c0_i32 : i32, i32
  }
  func.func @transform_1(%arg0: i32) -> (i32, i32) {
    %c0_i32 = arith.constant 0 : i32
    %c0_i32_0 = arith.constant 0 : i32
    %c0_i32_1 = arith.constant 0 : i32
    return %c0_i32, %c0_i32_0 : i32, i32
  }
  func.func @transform_2(%arg0: i32) -> (i32, i32) {
    %c0_i32 = arith.constant 0 : i32
    %c0_i32_0 = arith.constant 0 : i32
    %c0_i32_1 = arith.constant 0 : i32
    return %c0_i32, %c0_i32_0 : i32, i32
  }
  func.func @transform_3(%arg0: i32) -> (i32, i32) {
    %c0_i32 = arith.constant 0 : i32
    %c0_i32_0 = arith.constant 0 : i32
    %c0_i32_1 = arith.constant 0 : i32
    return %c0_i32, %c0_i32_0 : i32, i32
  }
  func.func @transform_4(%arg0: i32) -> (i32, i32) {
    %c0_i32 = arith.constant 0 : i32
    %c0_i32_0 = arith.constant 0 : i32
    %c0_i32_1 = arith.constant 0 : i32
    return %c0_i32, %c0_i32_0 : i32, i32
  }
  func.func @transform_5(%arg0: i32) -> (i32, i32) {
    %c0_i32 = arith.constant 0 : i32
    %c0_i32_0 = arith.constant 0 : i32
    %c0_i32_1 = arith.constant 0 : i32
    return %c0_i32, %c0_i32_0 : i32, i32
  }
  func.func @transform_6(%arg0: i32) -> (i32, i32) {
    %c0_i32 = arith.constant 0 : i32
    %c0_i32_0 = arith.constant 0 : i32
    %c0_i32_1 = arith.constant 0 : i32
    return %c0_i32, %c0_i32_0 : i32, i32
  }
  func.func @transform_7(%arg0: i32) -> (i32, i32) {
    %c0_i32 = arith.constant 0 : i32
    %c0_i32_0 = arith.constant 0 : i32
    %c0_i32_1 = arith.constant 0 : i32
    return %c0_i32, %c0_i32_0 : i32, i32
  }
  func.func @transform_8(%arg0: i32) -> (i32, i32) {
    %c0_i32 = arith.constant 0 : i32
    %c0_i32_0 = arith.constant 0 : i32
    %c0_i32_1 = arith.constant 0 : i32
    return %c0_i32, %c0_i32_0 : i32, i32
  }
  func.func @transform_9(%arg0: i32) -> (i32, i32) {
    %c0_i32 = arith.constant 0 : i32
    %c0_i32_0 = arith.constant 0 : i32
    %c0_i32_1 = arith.constant 0 : i32
    return %c0_i32, %c0_i32_0 : i32, i32
  }
  func.func @transform_10(%arg0: i32) -> (i32, i32) {
    %c0_i32 = arith.constant 0 : i32
    %c0_i32_0 = arith.constant 0 : i32
    return %arg0, %c0_i32 : i32, i32
  }
  func.func @transform_11(%arg0: i32) -> (i32, i32) {
    %c0_i32 = arith.constant 0 : i32
    %c0_i32_0 = arith.constant 0 : i32
    return %arg0, %c0_i32 : i32, i32
  }
}

</mosaic_0001>

<llo_original>
// kernel: tpu_custom_call.1
$region0: #{tpu_custom_call.1}
  #allocation0 [shape = 'u32[]', space=smem, size = 0x4, offset = 0x4, fixed_abs, tag = 'smem constant byte address 0x4 - core index']
  #allocation1 [shape = 'u32[144,128]{1,0:T(1,128)}', space=vmem, size = 0x12000, scoped, tag = 'internal scratch']
  %s0 = inlined_call_operand.hbm [shape: f32[8,768], index: 0, kind: input, shape index: {}]
  %s1 = inlined_call_operand.hbm [shape: bf16[768,256], index: 1, kind: input, shape index: {}]
  %s2 = inlined_call_operand.vmem [shape: bf16[256,128], index: 2, kind: input, shape index: {}]
  %s3 = inlined_call_operand.vmem [shape: bf16[128,64], index: 3, kind: input, shape index: {}]
  %s4 = inlined_call_operand.vmem [shape: bf16[64,32], index: 4, kind: input, shape index: {}]
  %s5 = inlined_call_operand.vmem [shape: bf16[32,64], index: 5, kind: input, shape index: {}]
  %s6 = inlined_call_operand.hbm [shape: bf16[64,128], index: 6, kind: input, shape index: {}]
  %s7 = inlined_call_operand.hbm [shape: bf16[128,256], index: 7, kind: input, shape index: {}]
  %s8 = inlined_call_operand.hbm [shape: bf16[256,768], index: 8, kind: input, shape index: {}]
  %s9 = inlined_call_operand.hbm [shape: f32[32,768], index: 9, kind: input, shape index: {}]
  %s10 = inlined_call_operand.hbm [shape: f32[8,768], index: 10, kind: output, shape index: {0}]
  %s11 = inlined_call_operand.hbm [shape: f32[8,128], index: 11, kind: output, shape index: {1}]
  %12 = xla_tuple %s10, %s11
  %s13 = sld [smem:[#allocation0]]
  $region82: #{tpu_custom_call.1} parent=0
    _
  %s15 = ssub.s32 1, %s13
  %s16 = scalar_select 0, %s15, %s13
  $region1: #{tpu_custom_call.1} parent=0
    #allocation2 [shape = 'u8[24576]{0}', space=vmem, size = 0x6000, scoped, tag = 'input window, operand 0, single buffered']
    #allocation3 [shape = 's32[1]{0}', space=sflag, size = 0x4, scoped, tag = 'scoped memory for tpu_custom_call.1']
    #allocation4 [shape = 's32[1]{0}', space=sflag, size = 0x4, scoped, tag = 'scoped memory for tpu_custom_call.1']
    #allocation5 [shape = 'u8[393216]{0}', space=vmem, size = 0x60000, scoped, tag = 'input window, operand 1, single buffered']
    #allocation6 [shape = 's32[1]{0}', space=sflag, size = 0x4, scoped, tag = 'scoped memory for tpu_custom_call.1']
    #allocation7 [shape = 'u8[16384]{0}', space=vmem, size = 0x4000, scoped, tag = 'input window, operand 6, single buffered']
    #allocation8 [shape = 'u8[65536]{0}', space=vmem, size = 0x10000, scoped, tag = 'input window, operand 7, single buffered']
    #allocation9 [shape = 's32[1]{0}', space=sflag, size = 0x4, scoped, tag = 'scoped memory for tpu_custom_call.1']
    #allocation10 [shape = 'u8[393216]{0}', space=vmem, size = 0x60000, scoped, tag = 'input window, operand 8, single buffered']
    #allocation11 [shape = 'u8[98304]{0}', space=vmem, size = 0x18000, scoped, tag = 'input window, operand 9, single buffered']
    #allocation12 [shape = 's32[1]{0}', space=sflag, size = 0x4, scoped, tag = 'scoped memory for tpu_custom_call.1']
    #allocation13 [shape = 'u8[24576]{0}', space=vmem, size = 0x6000, scoped, tag = 'output window, operand 0, single buffered']
    #allocation14 [shape = 'u8[4096]{0}', space=vmem, size = 0x1000, scoped, tag = 'output window, operand 1, single buffered']
    #allocation15 [shape = 's32[1]{0}', space=sflag, size = 0x4, scoped, tag = 'scoped memory for tpu_custom_call.1']
    %17 = vsyncpa [#allocation3], 0
    %18 = vsyncpa [#allocation6], 0
    %19 = vsyncpa [#allocation9], 0
    %20 = vsyncpa [#allocation12], 0
    %21 = vsyncpa [#allocation4], 0
    %22 = vsyncpa [#allocation15], 0
    // Predicated region
    $region2: #{tpu_custom_call.1} parent=1 // pred_check
      _
    $region3: #{tpu_custom_call.1} parent=1 // pred_check_branch
      %24 = sbr.rel (0) target = $region5
    $region4: #{tpu_custom_call.1} parent=1 // pred_region
      %s26 = ssub.s32 768, 768
      %27 = vsyncadd [#allocation3], %s26
      %s29 = sshll.u32 [#allocation2], 4
      %s30 = int_to_ptr.vmem [resolvable:$true] %s29
      %32 = dma.hbm_to_vmem [thread:$0]  %s0, 768, %s30, [#allocation3]
    $region5: #{tpu_custom_call.1} parent=1 // pred_fallthru
      _
    // Predicated region
    $region6: #{tpu_custom_call.1} parent=1 // pred_check
      _
    $region7: #{tpu_custom_call.1} parent=1 // pred_check_branch
      %34 = sbr.rel (0) target = $region9
    $region8: #{tpu_custom_call.1} parent=1 // pred_region
      %s36 = ssub.s32 12288, 12288
      %37 = vsyncadd [#allocation6], %s36
      %s38 = sshll.u32 [#allocation5], 4
      %s39 = int_to_ptr.vmem [resolvable:$true] %s38
      %44 = dma.hbm_to_vmem [thread:$0]  %s1, 12288, %s39, [#allocation6], 128, 128, 8
    $region9: #{tpu_custom_call.1} parent=1 // pred_fallthru
      _
    // Predicated region
    $region10: #{tpu_custom_call.1} parent=1 // pred_check
      _
    $region11: #{tpu_custom_call.1} parent=1 // pred_check_branch
      %46 = sbr.rel (0) target = $region13
    $region12: #{tpu_custom_call.1} parent=1 // pred_region
      _
    $region13: #{tpu_custom_call.1} parent=1 // pred_fallthru
      _
    // Predicated region
    $region14: #{tpu_custom_call.1} parent=1 // pred_check
      _
    $region15: #{tpu_custom_call.1} parent=1 // pred_check_branch
      %48 = sbr.rel (0) target = $region17
    $region16: #{tpu_custom_call.1} parent=1 // pred_region
      _
    $region17: #{tpu_custom_call.1} parent=1 // pred_fallthru
      _
    // Predicated region
    $region18: #{tpu_custom_call.1} parent=1 // pred_check
      _
    $region19: #{tpu_custom_call.1} parent=1 // pred_check_branch
      %50 = sbr.rel (0) target = $region21
    $region20: #{tpu_custom_call.1} parent=1 // pred_region
      _
    $region21: #{tpu_custom_call.1} parent=1 // pred_fallthru
      _
    // Predicated region
    $region22: #{tpu_custom_call.1} parent=1 // pred_check
      _
    $region23: #{tpu_custom_call.1} parent=1 // pred_check_branch
      %52 = sbr.rel (0) target = $region25
    $region24: #{tpu_custom_call.1} parent=1 // pred_region
      _
    $region25: #{tpu_custom_call.1} parent=1 // pred_fallthru
      _
    // Predicated region
    $region26: #{tpu_custom_call.1} parent=1 // pred_check
      _
    $region27: #{tpu_custom_call.1} parent=1 // pred_check_branch
      %54 = sbr.rel (0) target = $region29
    $region28: #{tpu_custom_call.1} parent=1 // pred_region
      %s56 = ssub.s32 512, 512
      %57 = vsyncadd [#allocation6], %s56
      %s58 = sshll.u32 [#allocation7], 4
      %s59 = int_to_ptr.vmem [resolvable:$true] %s58
      %64 = dma.hbm_to_vmem [thread:$0]  %s6, 512, %s59, [#allocation6], 64, 64, 4
    $region29: #{tpu_custom_call.1} parent=1 // pred_fallthru
      _
    // Predicated region
    $region30: #{tpu_custom_call.1} parent=1 // pred_check
      _
    $region31: #{tpu_custom_call.1} parent=1 // pred_check_branch
      %66 = sbr.rel (0) target = $region33
    $region32: #{tpu_custom_call.1} parent=1 // pred_region
      %s68 = ssub.s32 2048, 2048
      %69 = vsyncadd [#allocation9], %s68
      %s70 = sshll.u32 [#allocation8], 4
      %s71 = int_to_ptr.vmem [resolvable:$true] %s70
      %76 = dma.hbm_to_vmem [thread:$0]  %s7, 2048, %s71, [#allocation9], 128, 128, 8
    $region33: #{tpu_custom_call.1} parent=1 // pred_fallthru
      _
    // Predicated region
    $region34: #{tpu_custom_call.1} parent=1 // pred_check
      _
    $region35: #{tpu_custom_call.1} parent=1 // pred_check_branch
      %78 = sbr.rel (0) target = $region37
    $region36: #{tpu_custom_call.1} parent=1 // pred_region
      %s80 = ssub.s32 12288, 12288
      %81 = vsyncadd [#allocation9], %s80
      %s82 = sshll.u32 [#allocation10], 4
      %s83 = int_to_ptr.vmem [resolvable:$true] %s82
      %88 = dma.hbm_to_vmem [thread:$0]  %s8, 12288, %s83, [#allocation9], 384, 384, 24
    $region37: #{tpu_custom_call.1} parent=1 // pred_fallthru
      _
    // Predicated region
    $region38: #{tpu_custom_call.1} parent=1 // pred_check
      _
    $region39: #{tpu_custom_call.1} parent=1 // pred_check_branch
      %90 = sbr.rel (0) target = $region41
    $region40: #{tpu_custom_call.1} parent=1 // pred_region
      %s92 = ssub.s32 3072, 3072
      %93 = vsyncadd [#allocation12], %s92
      %s94 = sshll.u32 [#allocation11], 4
      %s95 = int_to_ptr.vmem [resolvable:$true] %s94
      %100 = dma.hbm_to_vmem [thread:$0]  %s9, 3072, %s95, [#allocation12], 768, 768, 48
    $region41: #{tpu_custom_call.1} parent=1 // pred_fallthru
      _
    // Predicated region
    $region42: #{tpu_custom_call.1} parent=1 // pred_check
      _
    $region43: #{tpu_custom_call.1} parent=1 // pred_check_branch
      %102 = sbr.rel (0) target = $region45
    $region44: #{tpu_custom_call.1} parent=1 // pred_region
      %103 = dma.done [#allocation3], 768
    $region45: #{tpu_custom_call.1} parent=1 // pred_fallthru
      _
    // Predicated region
    $region46: #{tpu_custom_call.1} parent=1 // pred_check
      _
    $region47: #{tpu_custom_call.1} parent=1 // pred_check_branch
      %105 = sbr.rel (0) target = $region49
    $region48: #{tpu_custom_call.1} parent=1 // pred_region
      %106 = dma.done [#allocation6], 12288
    $region49: #{tpu_custom_call.1} parent=1 // pred_fallthru
      _
    // Predicated region
    $region50: #{tpu_custom_call.1} parent=1 // pred_check
      _
    $region51: #{tpu_custom_call.1} parent=1 // pred_check_branch
      %108 = sbr.rel (0) target = $region53
    $region52: #{tpu_custom_call.1} parent=1 // pred_region
      %109 = dma.done [#allocation6], 512
    $region53: #{tpu_custom_call.1} parent=1 // pred_fallthru
      _
    // Predicated region
    $region54: #{tpu_custom_call.1} parent=1 // pred_check
      _
    $region55: #{tpu_custom_call.1} parent=1 // pred_check_branch
      %111 = sbr.rel (0) target = $region57
    $region56: #{tpu_custom_call.1} parent=1 // pred_region
      %112 = dma.done [#allocation9], 2048
    $region57: #{tpu_custom_call.1} parent=1 // pred_fallthru
      _
    // Predicated region
    $region58: #{tpu_custom_call.1} parent=1 // pred_check
      _
    $region59: #{tpu_custom_call.1} parent=1 // pred_check_branch
      %114 = sbr.rel (0) target = $region61
    $region60: #{tpu_custom_call.1} parent=1 // pred_region
      %115 = dma.done [#allocation9], 12288
    $region61: #{tpu_custom_call.1} parent=1 // pred_fallthru
      _
    // Predicated region
    $region62: #{tpu_custom_call.1} parent=1 // pred_check
      _
    $region63: #{tpu_custom_call.1} parent=1 // pred_check_branch
      %117 = sbr.rel (0) target = $region65
    $region64: #{tpu_custom_call.1} parent=1 // pred_region
      %118 = dma.done [#allocation12], 3072
    $region65: #{tpu_custom_call.1} parent=1 // pred_fallthru
      _
    %v120 = vld [vmem:[#allocation2] sm:$0xff]
    %v121 = vld [vmem:[#allocation2 + $0x8] sm:$0xff]
    %v122 = vld [vmem:[#allocation2 + $0x10] sm:$0xff]
    %v123 = vld [vmem:[#allocation2 + $0x18] sm:$0xff]
    %v124 = vld [vmem:[#allocation2 + $0x20] sm:$0xff]
    %v125 = vld [vmem:[#allocation2 + $0x28] sm:$0xff]
    %v126 = vld [vmem:[#allocation5] sm:$0xff]
    %v127 = vld [vmem:[#allocation5 + $0x8] sm:$0xff]
    %v128 = vld [vmem:[#allocation5 + $0x10] sm:$0xff]
    %v129 = vld [vmem:[#allocation5 + $0x18] sm:$0xff]
    %v130 = vld [vmem:[#allocation5 + $0x20] sm:$0xff]
    %v131 = vld [vmem:[#allocation5 + $0x28] sm:$0xff]
    %v132 = vld [vmem:[#allocation5 + $0x30] sm:$0xff]
    %v133 = vld [vmem:[#allocation5 + $0x38] sm:$0xff]
    %v134 = vld [vmem:[#allocation5 + $0x40] sm:$0xff]
    %v135 = vld [vmem:[#allocation5 + $0x48] sm:$0xff]
    %v136 = vld [vmem:[#allocation5 + $0x50] sm:$0xff]
    %v137 = vld [vmem:[#allocation5 + $0x58] sm:$0xff]
    %v138 = vld [vmem:[#allocation5 + $0x60] sm:$0xff]
    %v139 = vld [vmem:[#allocation5 + $0x68] sm:$0xff]
    %v140 = vld [vmem:[#allocation5 + $0x70] sm:$0xff]
    %v141 = vld [vmem:[#allocation5 + $0x78] sm:$0xff]
    %v142 = vld [vmem:[#allocation5 + $0x80] sm:$0xff]
    %v143 = vld [vmem:[#allocation5 + $0x88] sm:$0xff]
    %v144 = vld [vmem:[#allocation5 + $0x90] sm:$0xff]
    %v145 = vld [vmem:[#allocation5 + $0x98] sm:$0xff]
    %v146 = vld [vmem:[#allocation5 + $0xa0] sm:$0xff]
    %v147 = vld [vmem:[#allocation5 + $0xa8] sm:$0xff]
    %v148 = vld [vmem:[#allocation5 + $0xb0] sm:$0xff]
    %v149 = vld [vmem:[#allocation5 + $0xb8] sm:$0xff]
    %v150 = vld [vmem:[#allocation5 + $0xc0] sm:$0xff]
    %v151 = vld [vmem:[#allocation5 + $0xc8] sm:$0xff]
    %v152 = vld [vmem:[#allocation5 + $0xd0] sm:$0xff]
    %v153 = vld [vmem:[#allocation5 + $0xd8] sm:$0xff]
    %v154 = vld [vmem:[#allocation5 + $0xe0] sm:$0xff]
    %v155 = vld [vmem:[#allocation5 + $0xe8] sm:$0xff]
    %v156 = vld [vmem:[#allocation5 + $0xf0] sm:$0xff]
    %v157 = vld [vmem:[#allocation5 + $0xf8] sm:$0xff]
    %v158 = vld [vmem:[#allocation5 + $0x100] sm:$0xff]
    %v159 = vld [vmem:[#allocation5 + $0x108] sm:$0xff]
    %v160 = vld [vmem:[#allocation5 + $0x110] sm:$0xff]
    %v161 = vld [vmem:[#allocation5 + $0x118] sm:$0xff]
    %v162 = vld [vmem:[#allocation5 + $0x120] sm:$0xff]
    %v163 = vld [vmem:[#allocation5 + $0x128] sm:$0xff]
    %v164 = vld [vmem:[#allocation5 + $0x130] sm:$0xff]
    %v165 = vld [vmem:[#allocation5 + $0x138] sm:$0xff]
    %v166 = vld [vmem:[#allocation5 + $0x140] sm:$0xff]
    %v167 = vld [vmem:[#allocation5 + $0x148] sm:$0xff]
    %v168 = vld [vmem:[#allocation5 + $0x150] sm:$0xff]
    %v169 = vld [vmem:[#allocation5 + $0x158] sm:$0xff]
    %v170 = vld [vmem:[#allocation5 + $0x160] sm:$0xff]
    %v171 = vld [vmem:[#allocation5 + $0x168] sm:$0xff]
    %v172 = vld [vmem:[#allocation5 + $0x170] sm:$0xff]
    %v173 = vld [vmem:[#allocation5 + $0x178] sm:$0xff]
    %v174 = vld [vmem:[#allocation5 + $0x180] sm:$0xff]
    %v175 = vld [vmem:[#allocation5 + $0x188] sm:$0xff]
    %v176 = vld [vmem:[#allocation5 + $0x190] sm:$0xff]
    %v177 = vld [vmem:[#allocation5 + $0x198] sm:$0xff]
    %v178 = vld [vmem:[#allocation5 + $0x1a0] sm:$0xff]
    %v179 = vld [vmem:[#allocation5 + $0x1a8] sm:$0xff]
    %v180 = vld [vmem:[#allocation5 + $0x1b0] sm:$0xff]
    %v181 = vld [vmem:[#allocation5 + $0x1b8] sm:$0xff]
    %v182 = vld [vmem:[#allocation5 + $0x1c0] sm:$0xff]
    %v183 = vld [vmem:[#allocation5 + $0x1c8] sm:$0xff]
    %v184 = vld [vmem:[#allocation5 + $0x1d0] sm:$0xff]
    %v185 = vld [vmem:[#allocation5 + $0x1d8] sm:$0xff]
    %v186 = vld [vmem:[#allocation5 + $0x1e0] sm:$0xff]
    %v187 = vld [vmem:[#allocation5 + $0x1e8] sm:$0xff]
    %v188 = vld [vmem:[#allocation5 + $0x1f0] sm:$0xff]
    %v189 = vld [vmem:[#allocation5 + $0x1f8] sm:$0xff]
    %v190 = vld [vmem:[#allocation5 + $0x200] sm:$0xff]
    %v191 = vld [vmem:[#allocation5 + $0x208] sm:$0xff]
    %v192 = vld [vmem:[#allocation5 + $0x210] sm:$0xff]
    %v193 = vld [vmem:[#allocation5 + $0x218] sm:$0xff]
    %v194 = vld [vmem:[#allocation5 + $0x220] sm:$0xff]
    %v195 = vld [vmem:[#allocation5 + $0x228] sm:$0xff]
    %v196 = vld [vmem:[#allocation5 + $0x230] sm:$0xff]
    %v197 = vld [vmem:[#allocation5 + $0x238] sm:$0xff]
    %v198 = vld [vmem:[#allocation5 + $0x240] sm:$0xff]
    %v199 = vld [vmem:[#allocation5 + $0x248] sm:$0xff]
    %v200 = vld [vmem:[#allocation5 + $0x250] sm:$0xff]
    %v201 = vld [vmem:[#allocation5 + $0x258] sm:$0xff]
    %v202 = vld [vmem:[#allocation5 + $0x260] sm:$0xff]
    %v203 = vld [vmem:[#allocation5 + $0x268] sm:$0xff]
    %v204 = vld [vmem:[#allocation5 + $0x270] sm:$0xff]
    %v205 = vld [vmem:[#allocation5 + $0x278] sm:$0xff]
    %v206 = vld [vmem:[#allocation5 + $0x280] sm:$0xff]
    %v207 = vld [vmem:[#allocation5 + $0x288] sm:$0xff]
    %v208 = vld [vmem:[#allocation5 + $0x290] sm:$0xff]
    %v209 = vld [vmem:[#allocation5 + $0x298] sm:$0xff]
    %v210 = vld [vmem:[#allocation5 + $0x2a0] sm:$0xff]
    %v211 = vld [vmem:[#allocation5 + $0x2a8] sm:$0xff]
    %v212 = vld [vmem:[#allocation5 + $0x2b0] sm:$0xff]
    %v213 = vld [vmem:[#allocation5 + $0x2b8] sm:$0xff]
    %v214 = vld [vmem:[#allocation5 + $0x2c0] sm:$0xff]
    %v215 = vld [vmem:[#allocation5 + $0x2c8] sm:$0xff]
    %v216 = vld [vmem:[#allocation5 + $0x2d0] sm:$0xff]
    %v217 = vld [vmem:[#allocation5 + $0x2d8] sm:$0xff]
    %v218 = vld [vmem:[#allocation5 + $0x2e0] sm:$0xff]
    %v219 = vld [vmem:[#allocation5 + $0x2e8] sm:$0xff]
    %v220 = vld [vmem:[#allocation5 + $0x2f0] sm:$0xff]
    %v221 = vld [vmem:[#allocation5 + $0x2f8] sm:$0xff]
    %v222 = vld [vmem:[#allocation11] ss:$8 sm:$0x3]
    %v223 = vpack.c.bf16 %v120, %v120
    %v224 = vpack.c.bf16 %v121, %v121
    %v225 = vpack.c.bf16 %v122, %v122
    %v226 = vpack.c.bf16 %v123, %v123
    %v227 = vpack.c.bf16 %v124, %v124
    %v228 = vpack.c.bf16 %v125, %v125
    %v230 = vlaneseq
    %v231 = vshrl.u32 %v230, 7
    %v232 = vsub.s32 0, %v231
    %v233 = vrot.slane %v222, %v232
    %v234 = vlaneseq
    %v235 = vshrl.u32 %v234, 7
    %v236 = vsub.s32 1, %v235
    %v237 = vrot.slane %v222, %v236
    %v336 = vunpack.c.l.b16 %v126
    %v337 = vunpack.c.h.b16 %v126
    %v338 = vunpack.c.l.b16 %v127
    %v339 = vunpack.c.h.b16 %v127
    %v340 = vunpack.c.l.b16 %v128
    %v341 = vunpack.c.h.b16 %v128
    %v342 = vunpack.c.l.b16 %v129
    %v343 = vunpack.c.h.b16 %v129
    %v344 = vunpack.c.l.b16 %v130
    %v345 = vunpack.c.h.b16 %v130
    %v346 = vunpack.c.l.b16 %v131
    %v347 = vunpack.c.h.b16 %v131
    %v348 = vunpack.c.l.b16 %v132
    %v349 = vunpack.c.h.b16 %v132
    %v350 = vunpack.c.l.b16 %v133
    %v351 = vunpack.c.h.b16 %v133
    %v352 = vunpack.c.l.b16 %v134
    %v353 = vunpack.c.h.b16 %v134
    %v354 = vunpack.c.l.b16 %v135
    %v355 = vunpack.c.h.b16 %v135
    %v356 = vunpack.c.l.b16 %v136
    %v357 = vunpack.c.h.b16 %v136
    %v358 = vunpack.c.l.b16 %v137
    %v359 = vunpack.c.h.b16 %v137
    %v360 = vunpack.c.l.b16 %v138
    %v361 = vunpack.c.h.b16 %v138
    %v362 = vunpack.c.l.b16 %v139
    %v363 = vunpack.c.h.b16 %v139
    %v364 = vunpack.c.l.b16 %v140
    %v365 = vunpack.c.h.b16 %v140
    %v366 = vunpack.c.l.b16 %v141
    %v367 = vunpack.c.h.b16 %v141
    %v368 = vunpack.c.l.b16 %v142
    %v369 = vunpack.c.h.b16 %v142
    %v370 = vunpack.c.l.b16 %v143
    %v371 = vunpack.c.h.b16 %v143
    %v372 = vunpack.c.l.b16 %v144
    %v373 = vunpack.c.h.b16 %v144
    %v374 = vunpack.c.l.b16 %v145
    %v375 = vunpack.c.h.b16 %v145
    %v376 = vunpack.c.l.b16 %v146
    %v377 = vunpack.c.h.b16 %v146
    %v378 = vunpack.c.l.b16 %v147
    %v379 = vunpack.c.h.b16 %v147
    %v380 = vunpack.c.l.b16 %v148
    %v381 = vunpack.c.h.b16 %v148
    %v382 = vunpack.c.l.b16 %v149
    %v383 = vunpack.c.h.b16 %v149
    %v384 = vunpack.c.l.b16 %v150
    %v385 = vunpack.c.h.b16 %v150
    %v386 = vunpack.c.l.b16 %v151
    %v387 = vunpack.c.h.b16 %v151
    %v388 = vunpack.c.l.b16 %v152
    %v389 = vunpack.c.h.b16 %v152
    %v390 = vunpack.c.l.b16 %v153
    %v391 = vunpack.c.h.b16 %v153
    %v392 = vunpack.c.l.b16 %v154
    %v393 = vunpack.c.h.b16 %v154
    %v394 = vunpack.c.l.b16 %v155
    %v395 = vunpack.c.h.b16 %v155
    %v396 = vunpack.c.l.b16 %v156
    %v397 = vunpack.c.h.b16 %v156
    %v398 = vunpack.c.l.b16 %v157
    %v399 = vunpack.c.h.b16 %v157
    %v400 = vunpack.c.l.b16 %v158
    %v401 = vunpack.c.h.b16 %v158
    %v402 = vunpack.c.l.b16 %v159
    %v403 = vunpack.c.h.b16 %v159
    %v404 = vunpack.c.l.b16 %v160
    %v405 = vunpack.c.h.b16 %v160
    %v406 = vunpack.c.l.b16 %v161
    %v407 = vunpack.c.h.b16 %v161
    %v408 = vunpack.c.l.b16 %v162
    %v409 = vunpack.c.h.b16 %v162
    %v410 = vunpack.c.l.b16 %v163
    %v411 = vunpack.c.h.b16 %v163
    %v412 = vunpack.c.l.b16 %v164
    %v413 = vunpack.c.h.b16 %v164
    %v414 = vunpack.c.l.b16 %v165
    %v415 = vunpack.c.h.b16 %v165
    %v416 = vunpack.c.l.b16 %v166
    %v417 = vunpack.c.h.b16 %v166
    %v418 = vunpack.c.l.b16 %v167
    %v419 = vunpack.c.h.b16 %v167
    %v420 = vunpack.c.l.b16 %v168
    %v421 = vunpack.c.h.b16 %v168
    %v422 = vunpack.c.l.b16 %v169
    %v423 = vunpack.c.h.b16 %v169
    %v424 = vunpack.c.l.b16 %v170
    %v425 = vunpack.c.h.b16 %v170
    %v426 = vunpack.c.l.b16 %v171
    %v427 = vunpack.c.h.b16 %v171
    %v428 = vunpack.c.l.b16 %v172
    %v429 = vunpack.c.h.b16 %v172
    %v430 = vunpack.c.l.b16 %v173
    %v431 = vunpack.c.h.b16 %v173
    %v432 = vunpack.c.l.b16 %v174
    %v433 = vunpack.c.h.b16 %v174
    %v434 = vunpack.c.l.b16 %v175
    %v435 = vunpack.c.h.b16 %v175
    %v436 = vunpack.c.l.b16 %v176
    %v437 = vunpack.c.h.b16 %v176
    %v438 = vunpack.c.l.b16 %v177
    %v439 = vunpack.c.h.b16 %v177
    %v440 = vunpack.c.l.b16 %v178
    %v441 = vunpack.c.h.b16 %v178
    %v442 = vunpack.c.l.b16 %v179
    %v443 = vunpack.c.h.b16 %v179
    %v444 = vunpack.c.l.b16 %v180
    %v445 = vunpack.c.h.b16 %v180
    %v446 = vunpack.c.l.b16 %v181
    %v447 = vunpack.c.h.b16 %v181
    %v448 = vunpack.c.l.b16 %v182
    %v449 = vunpack.c.h.b16 %v182
    %v450 = vunpack.c.l.b16 %v183
    %v451 = vunpack.c.h.b16 %v183
    %v452 = vunpack.c.l.b16 %v184
    %v453 = vunpack.c.h.b16 %v184
    %v454 = vunpack.c.l.b16 %v185
    %v455 = vunpack.c.h.b16 %v185
    %v456 = vunpack.c.l.b16 %v186
    %v457 = vunpack.c.h.b16 %v186
    %v458 = vunpack.c.l.b16 %v187
    %v459 = vunpack.c.h.b16 %v187
    %v460 = vunpack.c.l.b16 %v188
    %v461 = vunpack.c.h.b16 %v188
    %v462 = vunpack.c.l.b16 %v189
    %v463 = vunpack.c.h.b16 %v189
    %v464 = vunpack.c.l.b16 %v190
    %v465 = vunpack.c.h.b16 %v190
    %v466 = vunpack.c.l.b16 %v191
    %v467 = vunpack.c.h.b16 %v191
    %v468 = vunpack.c.l.b16 %v192
    %v469 = vunpack.c.h.b16 %v192
    %v470 = vunpack.c.l.b16 %v193
    %v471 = vunpack.c.h.b16 %v193
    %v472 = vunpack.c.l.b16 %v194
    %v473 = vunpack.c.h.b16 %v194
    %v474 = vunpack.c.l.b16 %v195
    %v475 = vunpack.c.h.b16 %v195
    %v476 = vunpack.c.l.b16 %v196
    %v477 = vunpack.c.h.b16 %v196
    %v478 = vunpack.c.l.b16 %v197
    %v479 = vunpack.c.h.b16 %v197
    %v480 = vunpack.c.l.b16 %v198
    %v481 = vunpack.c.h.b16 %v198
    %v482 = vunpack.c.l.b16 %v199
    %v483 = vunpack.c.h.b16 %v199
    %v484 = vunpack.c.l.b16 %v200
    %v485 = vunpack.c.h.b16 %v200
    %v486 = vunpack.c.l.b16 %v201
    %v487 = vunpack.c.h.b16 %v201
    %v488 = vunpack.c.l.b16 %v202
    %v489 = vunpack.c.h.b16 %v202
    %v490 = vunpack.c.l.b16 %v203
    %v491 = vunpack.c.h.b16 %v203
    %v492 = vunpack.c.l.b16 %v204
    %v493 = vunpack.c.h.b16 %v204
    %v494 = vunpack.c.l.b16 %v205
    %v495 = vunpack.c.h.b16 %v205
    %v496 = vunpack.c.l.b16 %v206
    %v497 = vunpack.c.h.b16 %v206
    %v498 = vunpack.c.l.b16 %v207
    %v499 = vunpack.c.h.b16 %v207
    %v500 = vunpack.c.l.b16 %v208
    %v501 = vunpack.c.h.b16 %v208
    %v502 = vunpack.c.l.b16 %v209
    %v503 = vunpack.c.h.b16 %v209
    %v504 = vunpack.c.l.b16 %v210
    %v505 = vunpack.c.h.b16 %v210
    %v506 = vunpack.c.l.b16 %v211
    %v507 = vunpack.c.h.b16 %v211
    %v508 = vunpack.c.l.b16 %v212
    %v509 = vunpack.c.h.b16 %v212
    %v510 = vunpack.c.l.b16 %v213
    %v511 = vunpack.c.h.b16 %v213
    %v512 = vunpack.c.l.b16 %v214
    %v513 = vunpack.c.h.b16 %v214
    %v514 = vunpack.c.l.b16 %v215
    %v515 = vunpack.c.h.b16 %v215
    %v516 = vunpack.c.l.b16 %v216
    %v517 = vunpack.c.h.b16 %v216
    %v518 = vunpack.c.l.b16 %v217
    %v519 = vunpack.c.h.b16 %v217
    %v520 = vunpack.c.l.b16 %v218
    %v521 = vunpack.c.h.b16 %v218
    %v522 = vunpack.c.l.b16 %v219
    %v523 = vunpack.c.h.b16 %v219
    %v524 = vunpack.c.l.b16 %v220
    %v525 = vunpack.c.h.b16 %v220
    %v526 = vunpack.c.l.b16 %v221
    %v527 = vunpack.c.h.b16 %v221
    %v528 = vpack.c.b16 %v338, %v336
    %v529 = vpack.c.b16 %v339, %v337
    %v530 = vpack.c.b16 %v342, %v340
    %v531 = vpack.c.b16 %v343, %v341
    %v532 = vpack.c.b16 %v346, %v344
    %v533 = vpack.c.b16 %v347, %v345
    %v534 = vpack.c.b16 %v350, %v348
    %v535 = vpack.c.b16 %v351, %v349
    %v536 = vpack.c.b16 %v354, %v352
    %v537 = vpack.c.b16 %v355, %v353
    %v538 = vpack.c.b16 %v358, %v356
    %v539 = vpack.c.b16 %v359, %v357
    %v540 = vpack.c.b16 %v362, %v360
    %v541 = vpack.c.b16 %v363, %v361
    %v542 = vpack.c.b16 %v366, %v364
    %v543 = vpack.c.b16 %v367, %v365
    %v544 = vpack.c.b16 %v370, %v368
    %v545 = vpack.c.b16 %v371, %v369
    %v546 = vpack.c.b16 %v374, %v372
    %v547 = vpack.c.b16 %v375, %v373
    %v548 = vpack.c.b16 %v378, %v376
    %v549 = vpack.c.b16 %v379, %v377
    %v550 = vpack.c.b16 %v382, %v380
    %v551 = vpack.c.b16 %v383, %v381
    %v552 = vpack.c.b16 %v386, %v384
    %v553 = vpack.c.b16 %v387, %v385
    %v554 = vpack.c.b16 %v390, %v388
    %v555 = vpack.c.b16 %v391, %v389
    %v556 = vpack.c.b16 %v394, %v392
    %v557 = vpack.c.b16 %v395, %v393
    %v558 = vpack.c.b16 %v398, %v396
    %v559 = vpack.c.b16 %v399, %v397
    %v560 = vpack.c.b16 %v402, %v400
    %v561 = vpack.c.b16 %v403, %v401
    %v562 = vpack.c.b16 %v406, %v404
    %v563 = vpack.c.b16 %v407, %v405
    %v564 = vpack.c.b16 %v410, %v408
    %v565 = vpack.c.b16 %v411, %v409
    %v566 = vpack.c.b16 %v414, %v412
    %v567 = vpack.c.b16 %v415, %v413
    %v568 = vpack.c.b16 %v418, %v416
    %v569 = vpack.c.b16 %v419, %v417
    %v570 = vpack.c.b16 %v422, %v420
    %v571 = vpack.c.b16 %v423, %v421
    %v572 = vpack.c.b16 %v426, %v424
    %v573 = vpack.c.b16 %v427, %v425
    %v574 = vpack.c.b16 %v430, %v428
    %v575 = vpack.c.b16 %v431, %v429
    %v576 = vpack.c.b16 %v434, %v432
    %v577 = vpack.c.b16 %v435, %v433
    %v578 = vpack.c.b16 %v438, %v436
    %v579 = vpack.c.b16 %v439, %v437
    %v580 = vpack.c.b16 %v442, %v440
    %v581 = vpack.c.b16 %v443, %v441
    %v582 = vpack.c.b16 %v446, %v444
    %v583 = vpack.c.b16 %v447, %v445
    %v584 = vpack.c.b16 %v450, %v448
    %v585 = vpack.c.b16 %v451, %v449
    %v586 = vpack.c.b16 %v454, %v452
    %v587 = vpack.c.b16 %v455, %v453
    %v588 = vpack.c.b16 %v458, %v456
    %v589 = vpack.c.b16 %v459, %v457
    %v590 = vpack.c.b16 %v462, %v460
    %v591 = vpack.c.b16 %v463, %v461
    %v592 = vpack.c.b16 %v466, %v464
    %v593 = vpack.c.b16 %v467, %v465
    %v594 = vpack.c.b16 %v470, %v468
    %v595 = vpack.c.b16 %v471, %v469
    %v596 = vpack.c.b16 %v474, %v472
    %v597 = vpack.c.b16 %v475, %v473
    %v598 = vpack.c.b16 %v478, %v476
    %v599 = vpack.c.b16 %v479, %v477
    %v600 = vpack.c.b16 %v482, %v480
    %v601 = vpack.c.b16 %v483, %v481
    %v602 = vpack.c.b16 %v486, %v484
    %v603 = vpack.c.b16 %v487, %v485
    %v604 = vpack.c.b16 %v490, %v488
    %v605 = vpack.c.b16 %v491, %v489
    %v606 = vpack.c.b16 %v494, %v492
    %v607 = vpack.c.b16 %v495, %v493
    %v608 = vpack.c.b16 %v498, %v496
    %v609 = vpack.c.b16 %v499, %v497
    %v610 = vpack.c.b16 %v502, %v500
    %v611 = vpack.c.b16 %v503, %v501
    %v612 = vpack.c.b16 %v506, %v504
    %v613 = vpack.c.b16 %v507, %v505
    %v614 = vpack.c.b16 %v510, %v508
    %v615 = vpack.c.b16 %v511, %v509
    %v616 = vpack.c.b16 %v514, %v512
    %v617 = vpack.c.b16 %v515, %v513
    %v618 = vpack.c.b16 %v518, %v516
    %v619 = vpack.c.b16 %v519, %v517
    %v620 = vpack.c.b16 %v522, %v520
    %v621 = vpack.c.b16 %v523, %v521
    %v622 = vpack.c.b16 %v526, %v524
    %v623 = vpack.c.b16 %v527, %v525
    %720 = vmatprep.subr.bf16.mxu0 %v543
    %721 = vmatpush1.bf16.msra.mxu0 %v542
    %722 = vmatprep.subr.bf16.mxu0 %v541
    %723 = vmatpush1.bf16.msra.mxu0 %v540
    %724 = vmatprep.subr.bf16.mxu0 %v539
    %725 = vmatpush1.bf16.msra.mxu0 %v538
    %726 = vmatprep.subr.bf16.mxu0 %v537
    %727 = vmatpush1.bf16.msra.mxu0 %v536
    %728 = vmatprep.subr.bf16.mxu0 %v535
    %729 = vmatpush1.bf16.msra.mxu0 %v534
    %730 = vmatprep.subr.bf16.mxu0 %v533
    %731 = vmatpush1.bf16.msra.mxu0 %v532
    %732 = vmatprep.subr.bf16.mxu0 %v531
    %733 = vmatpush1.bf16.msra.mxu0 %v530
    %734 = vmatprep.subr.bf16.mxu0 %v529
    %735 = vmatpush1.bf16.msra.mxu0 %v528
    %736 = vmatprep.subr.bf16.mxu0 %v559
    %737 = vmatpush2.bf16.msra.mxu0 %v558
    %738 = vmatprep.subr.bf16.mxu0 %v557
    %739 = vmatpush2.bf16.msra.mxu0 %v556
    %740 = vmatprep.subr.bf16.mxu0 %v555
    %741 = vmatpush2.bf16.msra.mxu0 %v554
    %742 = vmatprep.subr.bf16.mxu0 %v553
    %743 = vmatpush2.bf16.msra.mxu0 %v552
    %744 = vmatprep.subr.bf16.mxu0 %v551
    %745 = vmatpush2.bf16.msra.mxu0 %v550
    %746 = vmatprep.subr.bf16.mxu0 %v549
    %747 = vmatpush2.bf16.msra.mxu0 %v548
    %748 = vmatprep.subr.bf16.mxu0 %v547
    %749 = vmatpush2.bf16.msra.mxu0 %v546
    %750 = vmatprep.subr.bf16.mxu0 %v545
    %751 = vmatpush2.bf16.msra.mxu0 %v544
    %752 = vmatprep.mubr.bf16.mxu0 %v224
    %753 = vmatmul.mubr.bf16.gmra.mxu0 %v223
    %v754 = vpop.f32.mrf.mxu0
    %v755 = vadd.f32 %v233, %v754
    %v756 = vpop.f32.mrf.mxu0
    %v757 = vadd.f32 %v237, %v756
    %v758 = vpop.f32.mrf.mxu0
    %v759 = vpop.f32.mrf.mxu0
    %760 = vdwg.mxu0
    %761 = vmatprep.subr.bf16.mxu0 %v575
    %762 = vmatpush1.bf16.msra.mxu0 %v574
    %763 = vmatprep.subr.bf16.mxu0 %v573
    %764 = vmatpush1.bf16.msra.mxu0 %v572
    %765 = vmatprep.subr.bf16.mxu0 %v571
    %766 = vmatpush1.bf16.msra.mxu0 %v570
    %767 = vmatprep.subr.bf16.mxu0 %v569
    %768 = vmatpush1.bf16.msra.mxu0 %v568
    %769 = vmatprep.subr.bf16.mxu0 %v567
    %770 = vmatpush1.bf16.msra.mxu0 %v566
    %771 = vmatprep.subr.bf16.mxu0 %v565
    %772 = vmatpush1.bf16.msra.mxu0 %v564
    %773 = vmatprep.subr.bf16.mxu0 %v563
    %774 = vmatpush1.bf16.msra.mxu0 %v562
    %775 = vmatprep.subr.bf16.mxu0 %v561
    %776 = vmatpush1.bf16.msra.mxu0 %v560
    %777 = vmatprep.subr.bf16.mxu0 %v591
    %778 = vmatpush2.bf16.msra.mxu0 %v590
    %779 = vmatprep.subr.bf16.mxu0 %v589
    %780 = vmatpush2.bf16.msra.mxu0 %v588
    %781 = vmatprep.subr.bf16.mxu0 %v587
    %782 = vmatpush2.bf16.msra.mxu0 %v586
    %783 = vmatprep.subr.bf16.mxu0 %v585
    %784 = vmatpush2.bf16.msra.mxu0 %v584
    %785 = vmatprep.subr.bf16.mxu0 %v583
    %786 = vmatpush2.bf16.msra.mxu0 %v582
    %787 = vmatprep.subr.bf16.mxu0 %v581
    %788 = vmatpush2.bf16.msra.mxu0 %v580
    %789 = vmatprep.subr.bf16.mxu0 %v579
    %790 = vmatpush2.bf16.msra.mxu0 %v578
    %791 = vmatprep.subr.bf16.mxu0 %v577
    %792 = vmatpush2.bf16.msra.mxu0 %v576
    %793 = vmatprep.mubr.bf16.mxu0 %v226
    %794 = vmatmul.mubr.bf16.gmra.mxu0 %v225
    %v795 = vpop.f32.mrf.mxu0
    %v796 = vadd.f32 %v755, %v795
    %v797 = vpop.f32.mrf.mxu0
    %v798 = vadd.f32 %v757, %v797
    %v799 = vpop.f32.mrf.mxu0
    %v800 = vpop.f32.mrf.mxu0
    %801 = vdwg.mxu0
    %802 = vmatprep.subr.bf16.mxu0 %v607
    %803 = vmatpush1.bf16.msra.mxu0 %v606
    %804 = vmatprep.subr.bf16.mxu0 %v605
    %805 = vmatpush1.bf16.msra.mxu0 %v604
    %806 = vmatprep.subr.bf16.mxu0 %v603
    %807 = vmatpush1.bf16.msra.mxu0 %v602
    %808 = vmatprep.subr.bf16.mxu0 %v601
    %809 = vmatpush1.bf16.msra.mxu0 %v600
    %810 = vmatprep.subr.bf16.mxu0 %v599
    %811 = vmatpush1.bf16.msra.mxu0 %v598
    %812 = vmatprep.subr.bf16.mxu0 %v597
    %813 = vmatpush1.bf16.msra.mxu0 %v596
    %814 = vmatprep.subr.bf16.mxu0 %v595
    %815 = vmatpush1.bf16.msra.mxu0 %v594
    %816 = vmatprep.subr.bf16.mxu0 %v593
    %817 = vmatpush1.bf16.msra.mxu0 %v592
    %818 = vmatprep.subr.bf16.mxu0 %v623
    %819 = vmatpush2.bf16.msra.mxu0 %v622
    %820 = vmatprep.subr.bf16.mxu0 %v621
    %821 = vmatpush2.bf16.msra.mxu0 %v620
    %822 = vmatprep.subr.bf16.mxu0 %v619
    %823 = vmatpush2.bf16.msra.mxu0 %v618
    %824 = vmatprep.subr.bf16.mxu0 %v617
    %825 = vmatpush2.bf16.msra.mxu0 %v616
    %826 = vmatprep.subr.bf16.mxu0 %v615
    %827 = vmatpush2.bf16.msra.mxu0 %v614
    %828 = vmatprep.subr.bf16.mxu0 %v613
    %829 = vmatpush2.bf16.msra.mxu0 %v612
    %830 = vmatprep.subr.bf16.mxu0 %v611
    %831 = vmatpush2.bf16.msra.mxu0 %v610
    %832 = vmatprep.subr.bf16.mxu0 %v609
    %833 = vmatpush2.bf16.msra.mxu0 %v608
    %834 = vmatprep.mubr.bf16.mxu0 %v228
    %835 = vmatmul.mubr.bf16.gmra.mxu0 %v227
    %v836 = vpop.f32.mrf.mxu0
    %v837 = vadd.f32 %v796, %v836
    %v838 = vpop.f32.mrf.mxu0
    %v839 = vadd.f32 %v798, %v838
    %v840 = vpop.f32.mrf.mxu0
    %v841 = vpop.f32.mrf.mxu0
    %842 = vdwg.mxu0
    %v843 = vtanh.pop %v837
    %v844 = vtanh.pop %v839
    %v845 = vld [vmem:[%s2] sm:$0xf]
    %v846 = vld [vmem:[%s2 + $0x4] sm:$0xf]
    %v847 = vld [vmem:[%s2 + $0x8] sm:$0xf]
    %v848 = vld [vmem:[%s2 + $0xc] sm:$0xf]
    %v849 = vld [vmem:[%s2 + $0x10] sm:$0xf]
    %v850 = vld [vmem:[%s2 + $0x14] sm:$0xf]
    %v851 = vld [vmem:[%s2 + $0x18] sm:$0xf]
    %v852 = vld [vmem:[%s2 + $0x1c] sm:$0xf]
    %v853 = vld [vmem:[%s2 + $0x20] sm:$0xf]
    %v854 = vld [vmem:[%s2 + $0x24] sm:$0xf]
    %v855 = vld [vmem:[%s2 + $0x28] sm:$0xf]
    %v856 = vld [vmem:[%s2 + $0x2c] sm:$0xf]
    %v857 = vld [vmem:[%s2 + $0x30] sm:$0xf]
    %v858 = vld [vmem:[%s2 + $0x34] sm:$0xf]
    %v859 = vld [vmem:[%s2 + $0x38] sm:$0xf]
    %v860 = vld [vmem:[%s2 + $0x3c] sm:$0xf]
    %v861 = vld [vmem:[%s2 + $0x40] sm:$0xf]
    %v862 = vld [vmem:[%s2 + $0x44] sm:$0xf]
    %v863 = vld [vmem:[%s2 + $0x48] sm:$0xf]
    %v864 = vld [vmem:[%s2 + $0x4c] sm:$0xf]
    %v865 = vld [vmem:[%s2 + $0x50] sm:$0xf]
    %v866 = vld [vmem:[%s2 + $0x54] sm:$0xf]
    %v867 = vld [vmem:[%s2 + $0x58] sm:$0xf]
    %v868 = vld [vmem:[%s2 + $0x5c] sm:$0xf]
    %v869 = vld [vmem:[%s2 + $0x60] sm:$0xf]
    %v870 = vld [vmem:[%s2 + $0x64] sm:$0xf]
    %v871 = vld [vmem:[%s2 + $0x68] sm:$0xf]
    %v872 = vld [vmem:[%s2 + $0x6c] sm:$0xf]
    %v873 = vld [vmem:[%s2 + $0x70] sm:$0xf]
    %v874 = vld [vmem:[%s2 + $0x74] sm:$0xf]
    %v875 = vld [vmem:[%s2 + $0x78] sm:$0xf]
    %v876 = vld [vmem:[%s2 + $0x7c] sm:$0xf]
    %v877 = vld [vmem:[#allocation11 + $0x1] ss:$0 sm:$0xff]
    %v878 = vpack.c.bf16 %v843, %v843
    %v879 = vpack.c.bf16 %v844, %v844
    %v912 = vunpack.c.l.b16 %v845
    %v913 = vunpack.c.l.b16 %v846
    %v914 = vunpack.c.l.b16 %v847
    %v915 = vunpack.c.l.b16 %v848
    %v916 = vunpack.c.l.b16 %v849
    %v917 = vunpack.c.l.b16 %v850
    %v918 = vunpack.c.l.b16 %v851
    %v919 = vunpack.c.l.b16 %v852
    %v920 = vunpack.c.l.b16 %v853
    %v921 = vunpack.c.l.b16 %v854
    %v922 = vunpack.c.l.b16 %v855
    %v923 = vunpack.c.l.b16 %v856
    %v924 = vunpack.c.l.b16 %v857
    %v925 = vunpack.c.l.b16 %v858
    %v926 = vunpack.c.l.b16 %v859
    %v927 = vunpack.c.l.b16 %v860
    %v928 = vunpack.c.l.b16 %v861
    %v929 = vunpack.c.l.b16 %v862
    %v930 = vunpack.c.l.b16 %v863
    %v931 = vunpack.c.l.b16 %v864
    %v932 = vunpack.c.l.b16 %v865
    %v933 = vunpack.c.l.b16 %v866
    %v934 = vunpack.c.l.b16 %v867
    %v935 = vunpack.c.l.b16 %v868
    %v936 = vunpack.c.l.b16 %v869
    %v937 = vunpack.c.l.b16 %v870
    %v938 = vunpack.c.l.b16 %v871
    %v939 = vunpack.c.l.b16 %v872
    %v940 = vunpack.c.l.b16 %v873
    %v941 = vunpack.c.l.b16 %v874
    %v942 = vunpack.c.l.b16 %v875
    %v943 = vunpack.c.l.b16 %v876
    %v944 = vpack.c.b16 %v913, %v912
    %v945 = vpack.c.b16 %v915, %v914
    %v946 = vpack.c.b16 %v917, %v916
    %v947 = vpack.c.b16 %v919, %v918
    %v948 = vpack.c.b16 %v921, %v920
    %v949 = vpack.c.b16 %v923, %v922
    %v950 = vpack.c.b16 %v925, %v924
    %v951 = vpack.c.b16 %v927, %v926
    %v952 = vpack.c.b16 %v929, %v928
    %v953 = vpack.c.b16 %v931, %v930
    %v954 = vpack.c.b16 %v933, %v932
    %v955 = vpack.c.b16 %v935, %v934
    %v956 = vpack.c.b16 %v937, %v936
    %v957 = vpack.c.b16 %v939, %v938
    %v958 = vpack.c.b16 %v941, %v940
    %v959 = vpack.c.b16 %v943, %v942
    %976 = vmatprep.subr.bf16.mxu0 0
    %977 = vmatpush1.bf16.msra.mxu0 %v951
    %978 = vmatprep.subr.bf16.mxu0 0
    %979 = vmatpush1.bf16.msra.mxu0 %v950
    %980 = vmatprep.subr.bf16.mxu0 0
    %981 = vmatpush1.bf16.msra.mxu0 %v949
    %982 = vmatprep.subr.bf16.mxu0 0
    %983 = vmatpush1.bf16.msra.mxu0 %v948
    %984 = vmatprep.subr.bf16.mxu0 0
    %985 = vmatpush1.bf16.msra.mxu0 %v947
    %986 = vmatprep.subr.bf16.mxu0 0
    %987 = vmatpush1.bf16.msra.mxu0 %v946
    %988 = vmatprep.subr.bf16.mxu0 0
    %989 = vmatpush1.bf16.msra.mxu0 %v945
    %990 = vmatprep.subr.bf16.mxu0 0
    %991 = vmatpush1.bf16.msra.mxu0 %v944
    %992 = vmatprep.subr.bf16.mxu0 0
    %993 = vmatpush2.bf16.msra.mxu0 %v959
    %994 = vmatprep.subr.bf16.mxu0 0
    %995 = vmatpush2.bf16.msra.mxu0 %v958
    %996 = vmatprep.subr.bf16.mxu0 0
    %997 = vmatpush2.bf16.msra.mxu0 %v957
    %998 = vmatprep.subr.bf16.mxu0 0
    %999 = vmatpush2.bf16.msra.mxu0 %v956
    %1000 = vmatprep.subr.bf16.mxu0 0
    %1001 = vmatpush2.bf16.msra.mxu0 %v955
    %1002 = vmatprep.subr.bf16.mxu0 0
    %1003 = vmatpush2.bf16.msra.mxu0 %v954
    %1004 = vmatprep.subr.bf16.mxu0 0
    %1005 = vmatpush2.bf16.msra.mxu0 %v953
    %1006 = vmatprep.subr.bf16.mxu0 0
    %1007 = vmatpush2.bf16.msra.mxu0 %v952
    %1008 = vmatprep.mubr.bf16.mxu0 %v879
    %1009 = vmatmul.mubr.bf16.gmra.mxu0 %v878
    %v1010 = vpop.f32.mrf.mxu0
    %v1011 = vadd.f32 %v877, %v1010
    %v1012 = vpop.f32.mrf.mxu0
    %v1013 = vpop.f32.mrf.mxu0
    %v1014 = vpop.f32.mrf.mxu0
    %1015 = vdwg.mxu0
    %v1016 = vtanh.pop %v1011
    %v1017 = vld [vmem:[%s3] sm:$0xf]
    %v1018 = vld [vmem:[%s3 + $0x4] sm:$0xf]
    %v1019 = vld [vmem:[%s3 + $0x8] sm:$0xf]
    %v1020 = vld [vmem:[%s3 + $0xc] sm:$0xf]
    %v1021 = vld [vmem:[%s3 + $0x10] sm:$0xf]
    %v1022 = vld [vmem:[%s3 + $0x14] sm:$0xf]
    %v1023 = vld [vmem:[%s3 + $0x18] sm:$0xf]
    %v1024 = vld [vmem:[%s3 + $0x1c] sm:$0xf]
    %v1025 = vld [vmem:[%s3 + $0x20] sm:$0xf]
    %v1026 = vld [vmem:[%s3 + $0x24] sm:$0xf]
    %v1027 = vld [vmem:[%s3 + $0x28] sm:$0xf]
    %v1028 = vld [vmem:[%s3 + $0x2c] sm:$0xf]
    %v1029 = vld [vmem:[%s3 + $0x30] sm:$0xf]
    %v1030 = vld [vmem:[%s3 + $0x34] sm:$0xf]
    %v1031 = vld [vmem:[%s3 + $0x38] sm:$0xf]
    %v1032 = vld [vmem:[%s3 + $0x3c] sm:$0xf]
    %v1033 = vld [vmem:[#allocation11 + $0x2] ss:$0 sm:$0xff]
    %v1034 = vpack.c.bf16 %v1016, %v1016
    %v1051 = vunpack.c.l.b16 %v1017
    %v1052 = vunpack.c.l.b16 %v1018
    %v1053 = vunpack.c.l.b16 %v1019
    %v1054 = vunpack.c.l.b16 %v1020
    %v1055 = vunpack.c.l.b16 %v1021
    %v1056 = vunpack.c.l.b16 %v1022
    %v1057 = vunpack.c.l.b16 %v1023
    %v1058 = vunpack.c.l.b16 %v1024
    %v1059 = vunpack.c.l.b16 %v1025
    %v1060 = vunpack.c.l.b16 %v1026
    %v1061 = vunpack.c.l.b16 %v1027
    %v1062 = vunpack.c.l.b16 %v1028
    %v1063 = vunpack.c.l.b16 %v1029
    %v1064 = vunpack.c.l.b16 %v1030
    %v1065 = vunpack.c.l.b16 %v1031
    %v1066 = vunpack.c.l.b16 %v1032
    %v1067 = vpack.c.b16 %v1052, %v1051
    %v1068 = vpack.c.b16 %v1054, %v1053
    %v1069 = vpack.c.b16 %v1056, %v1055
    %v1070 = vpack.c.b16 %v1058, %v1057
    %v1071 = vpack.c.b16 %v1060, %v1059
    %v1072 = vpack.c.b16 %v1062, %v1061
    %v1073 = vpack.c.b16 %v1064, %v1063
    %v1074 = vpack.c.b16 %v1066, %v1065
    %1083 = vmatprep.subr.bf16.mxu0 0
    %1084 = vmatpush1.bf16.msra.mxu0 %v1074
    %1085 = vmatprep.subr.bf16.mxu0 0
    %1086 = vmatpush1.bf16.msra.mxu0 %v1073
    %1087 = vmatprep.subr.bf16.mxu0 0
    %1088 = vmatpush1.bf16.msra.mxu0 %v1072
    %1089 = vmatprep.subr.bf16.mxu0 0
    %1090 = vmatpush1.bf16.msra.mxu0 %v1071
    %1091 = vmatprep.subr.bf16.mxu0 0
    %1092 = vmatpush1.bf16.msra.mxu0 %v1070
    %1093 = vmatprep.subr.bf16.mxu0 0
    %1094 = vmatpush1.bf16.msra.mxu0 %v1069
    %1095 = vmatprep.subr.bf16.mxu0 0
    %1096 = vmatpush1.bf16.msra.mxu0 %v1068
    %1097 = vmatprep.subr.bf16.mxu0 0
    %1098 = vmatpush1.bf16.msra.mxu0 %v1067
    %1099 = vmatprep.subr.bf16.mxu0 0
    %1100 = vmatpush2.bf16.msra.mxu0 0
    %1101 = vmatprep.subr.bf16.mxu0 0
    %1102 = vmatpush2.bf16.msra.mxu0 0
    %1103 = vmatprep.subr.bf16.mxu0 0
    %1104 = vmatpush2.bf16.msra.mxu0 0
    %1105 = vmatprep.subr.bf16.mxu0 0
    %1106 = vmatpush2.bf16.msra.mxu0 0
    %1107 = vmatprep.subr.bf16.mxu0 0
    %1108 = vmatpush2.bf16.msra.mxu0 0
    %1109 = vmatprep.subr.bf16.mxu0 0
    %1110 = vmatpush2.bf16.msra.mxu0 0
    %1111 = vmatprep.subr.bf16.mxu0 0
    %1112 = vmatpush2.bf16.msra.mxu0 0
    %1113 = vmatprep.subr.bf16.mxu0 0
    %1114 = vmatpush2.bf16.msra.mxu0 0
    %1115 = vmatprep.mubr.bf16.mxu0 0
    %1116 = vmatmul.mubr.bf16.gmra.mxu0 %v1034
    %v1117 = vpop.f32.mrf.mxu0
    %v1118 = vadd.f32 %v1033, %v1117
    %v1119 = vpop.f32.mrf.mxu0
    %v1120 = vpop.f32.mrf.mxu0
    %v1121 = vpop.f32.mrf.mxu0
    %1122 = vdwg.mxu0
    %v1123 = vtanh.pop %v1118
    %v1124 = vld [vmem:[%s4] sm:$0xf]
    %v1125 = vld [vmem:[%s4 + $0x4] sm:$0xf]
    %v1126 = vld [vmem:[%s4 + $0x8] sm:$0xf]
    %v1127 = vld [vmem:[%s4 + $0xc] sm:$0xf]
    %v1128 = vld [vmem:[%s4 + $0x10] sm:$0xf]
    %v1129 = vld [vmem:[%s4 + $0x14] sm:$0xf]
    %v1130 = vld [vmem:[%s4 + $0x18] sm:$0xf]
    %v1131 = vld [vmem:[%s4 + $0x1c] sm:$0xf]
    %v1132 = vld [vmem:[#allocation11 + $0x3] ss:$0 sm:$0xff]
    %v1133 = vpack.c.bf16 %v1123, %v1123
    %v1142 = vunpack.c.l.b16 %v1124
    %v1143 = vunpack.c.l.b16 %v1125
    %v1144 = vunpack.c.l.b16 %v1126
    %v1145 = vunpack.c.l.b16 %v1127
    %v1146 = vunpack.c.l.b16 %v1128
    %v1147 = vunpack.c.l.b16 %v1129
    %v1148 = vunpack.c.l.b16 %v1130
    %v1149 = vunpack.c.l.b16 %v1131
    %v1150 = vpack.c.b16 %v1143, %v1142
    %v1151 = vpack.c.b16 %v1145, %v1144
    %v1152 = vpack.c.b16 %v1147, %v1146
    %v1153 = vpack.c.b16 %v1149, %v1148
    %vm1158 = vcmask 523264
    %v1160 = vsel %vm1158, %v1133, 0
    %1162 = vmatprep.subr.bf16.mxu0 0
    %1163 = vmatpush1.bf16.msra.mxu0 0
    %1164 = vmatprep.subr.bf16.mxu0 0
    %1165 = vmatpush1.bf16.msra.mxu0 0
    %1166 = vmatprep.subr.bf16.mxu0 0
    %1167 = vmatpush1.bf16.msra.mxu0 0
    %1168 = vmatprep.subr.bf16.mxu0 0
    %1169 = vmatpush1.bf16.msra.mxu0 0
    %1170 = vmatprep.subr.bf16.mxu0 0
    %1171 = vmatpush1.bf16.msra.mxu0 %v1153
    %1172 = vmatprep.subr.bf16.mxu0 0
    %1173 = vmatpush1.bf16.msra.mxu0 %v1152
    %1174 = vmatprep.subr.bf16.mxu0 0
    %1175 = vmatpush1.bf16.msra.mxu0 %v1151
    %1176 = vmatprep.subr.bf16.mxu0 0
    %1177 = vmatpush1.bf16.msra.mxu0 %v1150
    %1178 = vmatprep.subr.bf16.mxu0 0
    %1179 = vmatpush2.bf16.msra.mxu0 0
    %1180 = vmatprep.subr.bf16.mxu0 0
    %1181 = vmatpush2.bf16.msra.mxu0 0
    %1182 = vmatprep.subr.bf16.mxu0 0
    %1183 = vmatpush2.bf16.msra.mxu0 0
    %1184 = vmatprep.subr.bf16.mxu0 0
    %1185 = vmatpush2.bf16.msra.mxu0 0
    %1186 = vmatprep.subr.bf16.mxu0 0
    %1187 = vmatpush2.bf16.msra.mxu0 0
    %1188 = vmatprep.subr.bf16.mxu0 0
    %1189 = vmatpush2.bf16.msra.mxu0 0
    %1190 = vmatprep.subr.bf16.mxu0 0
    %1191 = vmatpush2.bf16.msra.mxu0 0
    %1192 = vmatprep.subr.bf16.mxu0 0
    %1193 = vmatpush2.bf16.msra.mxu0 0
    %1194 = vmatprep.mubr.bf16.mxu0 0
    %1195 = vmatmul.mubr.bf16.gmra.mxu0 %v1160
    %v1196 = vpop.f32.mrf.mxu0
    %v1197 = vadd.f32 %v1132, %v1196
    %v1198 = vpop.f32.mrf.mxu0
    %v1199 = vpop.f32.mrf.mxu0
    %v1200 = vpop.f32.mrf.mxu0
    %1201 = vdwg.mxu0
    %v1202 = vtanh.pop %v1197
    %v1203 = vld [vmem:[#allocation11 + $0x30] ss:$0 sm:$0xff]
    %v1204 = vld [vmem:[#allocation11 + $0x33] ss:$0 sm:$0xff]
    %v1205 = vmul.f32 %v1202, %v1203
    %vm1206 = vcmask 261120
    %v1207 = vsel %vm1206, %v1205, 0.0
    %1208 = vadd.xlane.f32.xlu0 %v1207
    %v1209 = vpop.xlane.xlu0 %1208
    %v1210 = vadd.f32 %v1209, %v1204
    %v1211 = vld [vmem:[#allocation11 + $0x31] ss:$0 sm:$0xff]
    %v1212 = vld [vmem:[#allocation11 + $0x32] ss:$0 sm:$0xff]
    %1214 = vset.pattern.permute.xlu0 0
    %1215 = vperm.xlu0 %1214, %v1210
    %v1216 = vpop.permute.xlu0 %1215
    %v1218 = vmul.f32 %v1216, %v1211
    %v1219 = vadd.f32 %v1218, %v1212
    %v1220 = vld [vmem:[%s5] sm:$0xf]
    %v1221 = vld [vmem:[%s5 + $0x4] sm:$0xf]
    %v1222 = vld [vmem:[%s5 + $0x8] sm:$0xf]
    %v1223 = vld [vmem:[%s5 + $0xc] sm:$0xf]
    %v1224 = vld [vmem:[#allocation11 + $0x4] ss:$0 sm:$0xff]
    %v1225 = vpack.c.bf16 %v1219, %v1219
    %v1230 = vunpack.c.l.b16 %v1220
    %v1231 = vunpack.c.l.b16 %v1221
    %v1232 = vunpack.c.l.b16 %v1222
    %v1233 = vunpack.c.l.b16 %v1223
    %v1234 = vpack.c.b16 %v1231, %v1230
    %v1235 = vpack.c.b16 %v1233, %v1232
    %v1239 = vsel %vm1206, %v1225, 0
    %1241 = vmatprep.subr.bf16.mxu0 0
    %1242 = vmatpush1.bf16.msra.mxu0 0
    %1243 = vmatprep.subr.bf16.mxu0 0
    %1244 = vmatpush1.bf16.msra.mxu0 0
    %1245 = vmatprep.subr.bf16.mxu0 0
    %1246 = vmatpush1.bf16.msra.mxu0 0
    %1247 = vmatprep.subr.bf16.mxu0 0
    %1248 = vmatpush1.bf16.msra.mxu0 0
    %1249 = vmatprep.subr.bf16.mxu0 0
    %1250 = vmatpush1.bf16.msra.mxu0 0
    %1251 = vmatprep.subr.bf16.mxu0 0
    %1252 = vmatpush1.bf16.msra.mxu0 0
    %1253 = vmatprep.subr.bf16.mxu0 0
    %1254 = vmatpush1.bf16.msra.mxu0 %v1235
    %1255 = vmatprep.subr.bf16.mxu0 0
    %1256 = vmatpush1.bf16.msra.mxu0 %v1234
    %1257 = vmatprep.subr.bf16.mxu0 0
    %1258 = vmatpush2.bf16.msra.mxu0 0
    %1259 = vmatprep.subr.bf16.mxu0 0
    %1260 = vmatpush2.bf16.msra.mxu0 0
    %1261 = vmatprep.subr.bf16.mxu0 0
    %1262 = vmatpush2.bf16.msra.mxu0 0
    %1263 = vmatprep.subr.bf16.mxu0 0
    %1264 = vmatpush2.bf16.msra.mxu0 0
    %1265 = vmatprep.subr.bf16.mxu0 0
    %1266 = vmatpush2.bf16.msra.mxu0 0
    %1267 = vmatprep.subr.bf16.mxu0 0
    %1268 = vmatpush2.bf16.msra.mxu0 0
    %1269 = vmatprep.subr.bf16.mxu0 0
    %1270 = vmatpush2.bf16.msra.mxu0 0
    %1271 = vmatprep.subr.bf16.mxu0 0
    %1272 = vmatpush2.bf16.msra.mxu0 0
    %1273 = vmatprep.mubr.bf16.mxu0 0
    %1274 = vmatmul.mubr.bf16.gmra.mxu0 %v1239
    %v1275 = vpop.f32.mrf.mxu0
    %v1276 = vadd.f32 %v1224, %v1275
    %v1277 = vpop.f32.mrf.mxu0
    %v1278 = vpop.f32.mrf.mxu0
    %v1279 = vpop.f32.mrf.mxu0
    %1280 = vdwg.mxu0
    %v1281 = vtanh.pop %v1276
    %v1282 = vld [vmem:[#allocation7] sm:$0xf]
    %v1283 = vld [vmem:[#allocation7 + $0x4] sm:$0xf]
    %v1284 = vld [vmem:[#allocation7 + $0x8] sm:$0xf]
    %v1285 = vld [vmem:[#allocation7 + $0xc] sm:$0xf]
    %v1286 = vld [vmem:[#allocation7 + $0x10] sm:$0xf]
    %v1287 = vld [vmem:[#allocation7 + $0x14] sm:$0xf]
    %v1288 = vld [vmem:[#allocation7 + $0x18] sm:$0xf]
    %v1289 = vld [vmem:[#allocation7 + $0x1c] sm:$0xf]
    %v1290 = vld [vmem:[#allocation11 + $0x5] ss:$0 sm:$0xff]
    %v1291 = vpack.c.bf16 %v1281, %v1281
    %v1300 = vunpack.c.l.b16 %v1282
    %v1301 = vunpack.c.l.b16 %v1283
    %v1302 = vunpack.c.l.b16 %v1284
    %v1303 = vunpack.c.l.b16 %v1285
    %v1304 = vunpack.c.l.b16 %v1286
    %v1305 = vunpack.c.l.b16 %v1287
    %v1306 = vunpack.c.l.b16 %v1288
    %v1307 = vunpack.c.l.b16 %v1289
    %v1308 = vpack.c.b16 %v1301, %v1300
    %v1309 = vpack.c.b16 %v1303, %v1302
    %v1310 = vpack.c.b16 %v1305, %v1304
    %v1311 = vpack.c.b16 %v1307, %v1306
    %v1317 = vsel %vm1158, %v1291, 0
    %1319 = vmatprep.subr.bf16.mxu0 0
    %1320 = vmatpush1.bf16.msra.mxu0 0
    %1321 = vmatprep.subr.bf16.mxu0 0
    %1322 = vmatpush1.bf16.msra.mxu0 0
    %1323 = vmatprep.subr.bf16.mxu0 0
    %1324 = vmatpush1.bf16.msra.mxu0 0
    %1325 = vmatprep.subr.bf16.mxu0 0
    %1326 = vmatpush1.bf16.msra.mxu0 0
    %1327 = vmatprep.subr.bf16.mxu0 0
    %1328 = vmatpush1.bf16.msra.mxu0 %v1311
    %1329 = vmatprep.subr.bf16.mxu0 0
    %1330 = vmatpush1.bf16.msra.mxu0 %v1310
    %1331 = vmatprep.subr.bf16.mxu0 0
    %1332 = vmatpush1.bf16.msra.mxu0 %v1309
    %1333 = vmatprep.subr.bf16.mxu0 0
    %1334 = vmatpush1.bf16.msra.mxu0 %v1308
    %1335 = vmatprep.subr.bf16.mxu0 0
    %1336 = vmatpush2.bf16.msra.mxu0 0
    %1337 = vmatprep.subr.bf16.mxu0 0
    %1338 = vmatpush2.bf16.msra.mxu0 0
    %1339 = vmatprep.subr.bf16.mxu0 0
    %1340 = vmatpush2.bf16.msra.mxu0 0
    %1341 = vmatprep.subr.bf16.mxu0 0
    %1342 = vmatpush2.bf16.msra.mxu0 0
    %1343 = vmatprep.subr.bf16.mxu0 0
    %1344 = vmatpush2.bf16.msra.mxu0 0
    %1345 = vmatprep.subr.bf16.mxu0 0
    %1346 = vmatpush2.bf16.msra.mxu0 0
    %1347 = vmatprep.subr.bf16.mxu0 0
    %1348 = vmatpush2.bf16.msra.mxu0 0
    %1349 = vmatprep.subr.bf16.mxu0 0
    %1350 = vmatpush2.bf16.msra.mxu0 0
    %1351 = vmatprep.mubr.bf16.mxu0 0
    %1352 = vmatmul.mubr.bf16.gmra.mxu0 %v1317
    %v1353 = vpop.f32.mrf.mxu0
    %v1354 = vadd.f32 %v1290, %v1353
    %v1355 = vpop.f32.mrf.mxu0
    %v1356 = vpop.f32.mrf.mxu0
    %v1357 = vpop.f32.mrf.mxu0
    %1358 = vdwg.mxu0
    %v1359 = vtanh.pop %v1354
    %v1360 = vld [vmem:[#allocation8] sm:$0xff]
    %v1361 = vld [vmem:[#allocation8 + $0x8] sm:$0xff]
    %v1362 = vld [vmem:[#allocation8 + $0x10] sm:$0xff]
    %v1363 = vld [vmem:[#allocation8 + $0x18] sm:$0xff]
    %v1364 = vld [vmem:[#allocation8 + $0x20] sm:$0xff]
    %v1365 = vld [vmem:[#allocation8 + $0x28] sm:$0xff]
    %v1366 = vld [vmem:[#allocation8 + $0x30] sm:$0xff]
    %v1367 = vld [vmem:[#allocation8 + $0x38] sm:$0xff]
    %v1368 = vld [vmem:[#allocation8 + $0x40] sm:$0xff]
    %v1369 = vld [vmem:[#allocation8 + $0x48] sm:$0xff]
    %v1370 = vld [vmem:[#allocation8 + $0x50] sm:$0xff]
    %v1371 = vld [vmem:[#allocation8 + $0x58] sm:$0xff]
    %v1372 = vld [vmem:[#allocation8 + $0x60] sm:$0xff]
    %v1373 = vld [vmem:[#allocation8 + $0x68] sm:$0xff]
    %v1374 = vld [vmem:[#allocation8 + $0x70] sm:$0xff]
    %v1375 = vld [vmem:[#allocation8 + $0x78] sm:$0xff]
    %s1376 = scalar_lea.vmem [#allocation11], 6
    %v1377 = vld [vmem:[%s1376] ss:$8 sm:$0x3]
    %v1378 = vpack.c.bf16 %v1359, %v1359
    %v1380 = vlaneseq
    %v1381 = vshrl.u32 %v1380, 7
    %v1382 = vsub.s32 0, %v1381
    %v1383 = vrot.slane %v1377, %v1382
    %v1384 = vlaneseq
    %v1385 = vshrl.u32 %v1384, 7
    %v1386 = vsub.s32 1, %v1385
    %v1387 = vrot.slane %v1377, %v1386
    %v1406 = vunpack.c.l.b16 %v1360
    %v1407 = vunpack.c.h.b16 %v1360
    %v1408 = vunpack.c.l.b16 %v1361
    %v1409 = vunpack.c.h.b16 %v1361
    %v1410 = vunpack.c.l.b16 %v1362
    %v1411 = vunpack.c.h.b16 %v1362
    %v1412 = vunpack.c.l.b16 %v1363
    %v1413 = vunpack.c.h.b16 %v1363
    %v1414 = vunpack.c.l.b16 %v1364
    %v1415 = vunpack.c.h.b16 %v1364
    %v1416 = vunpack.c.l.b16 %v1365
    %v1417 = vunpack.c.h.b16 %v1365
    %v1418 = vunpack.c.l.b16 %v1366
    %v1419 = vunpack.c.h.b16 %v1366
    %v1420 = vunpack.c.l.b16 %v1367
    %v1421 = vunpack.c.h.b16 %v1367
    %v1422 = vunpack.c.l.b16 %v1368
    %v1423 = vunpack.c.h.b16 %v1368
    %v1424 = vunpack.c.l.b16 %v1369
    %v1425 = vunpack.c.h.b16 %v1369
    %v1426 = vunpack.c.l.b16 %v1370
    %v1427 = vunpack.c.h.b16 %v1370
    %v1428 = vunpack.c.l.b16 %v1371
    %v1429 = vunpack.c.h.b16 %v1371
    %v1430 = vunpack.c.l.b16 %v1372
    %v1431 = vunpack.c.h.b16 %v1372
    %v1432 = vunpack.c.l.b16 %v1373
    %v1433 = vunpack.c.h.b16 %v1373
    %v1434 = vunpack.c.l.b16 %v1374
    %v1435 = vunpack.c.h.b16 %v1374
    %v1436 = vunpack.c.l.b16 %v1375
    %v1437 = vunpack.c.h.b16 %v1375
    %v1438 = vpack.c.b16 %v1408, %v1406
    %v1439 = vpack.c.b16 %v1409, %v1407
    %v1440 = vpack.c.b16 %v1412, %v1410
    %v1441 = vpack.c.b16 %v1413, %v1411
    %v1442 = vpack.c.b16 %v1416, %v1414
    %v1443 = vpack.c.b16 %v1417, %v1415
    %v1444 = vpack.c.b16 %v1420, %v1418
    %v1445 = vpack.c.b16 %v1421, %v1419
    %v1446 = vpack.c.b16 %v1424, %v1422
    %v1447 = vpack.c.b16 %v1425, %v1423
    %v1448 = vpack.c.b16 %v1428, %v1426
    %v1449 = vpack.c.b16 %v1429, %v1427
    %v1450 = vpack.c.b16 %v1432, %v1430
    %v1451 = vpack.c.b16 %v1433, %v1431
    %v1452 = vpack.c.b16 %v1436, %v1434
    %v1453 = vpack.c.b16 %v1437, %v1435
    %1470 = vmatprep.subr.bf16.mxu0 %v1453
    %1471 = vmatpush1.bf16.msra.mxu0 %v1452
    %1472 = vmatprep.subr.bf16.mxu0 %v1451
    %1473 = vmatpush1.bf16.msra.mxu0 %v1450
    %1474 = vmatprep.subr.bf16.mxu0 %v1449
    %1475 = vmatpush1.bf16.msra.mxu0 %v1448
    %1476 = vmatprep.subr.bf16.mxu0 %v1447
    %1477 = vmatpush1.bf16.msra.mxu0 %v1446
    %1478 = vmatprep.subr.bf16.mxu0 %v1445
    %1479 = vmatpush1.bf16.msra.mxu0 %v1444
    %1480 = vmatprep.subr.bf16.mxu0 %v1443
    %1481 = vmatpush1.bf16.msra.mxu0 %v1442
    %1482 = vmatprep.subr.bf16.mxu0 %v1441
    %1483 = vmatpush1.bf16.msra.mxu0 %v1440
    %1484 = vmatprep.subr.bf16.mxu0 %v1439
    %1485 = vmatpush1.bf16.msra.mxu0 %v1438
    %1486 = vmatprep.subr.bf16.mxu0 0
    %1487 = vmatpush2.bf16.msra.mxu0 0
    %1488 = vmatprep.subr.bf16.mxu0 0
    %1489 = vmatpush2.bf16.msra.mxu0 0
    %1490 = vmatprep.subr.bf16.mxu0 0
    %1491 = vmatpush2.bf16.msra.mxu0 0
    %1492 = vmatprep.subr.bf16.mxu0 0
    %1493 = vmatpush2.bf16.msra.mxu0 0
    %1494 = vmatprep.subr.bf16.mxu0 0
    %1495 = vmatpush2.bf16.msra.mxu0 0
    %1496 = vmatprep.subr.bf16.mxu0 0
    %1497 = vmatpush2.bf16.msra.mxu0 0
    %1498 = vmatprep.subr.bf16.mxu0 0
    %1499 = vmatpush2.bf16.msra.mxu0 0
    %1500 = vmatprep.subr.bf16.mxu0 0
    %1501 = vmatpush2.bf16.msra.mxu0 0
    %1502 = vmatprep.mubr.bf16.mxu0 0
    %1503 = vmatmul.mubr.bf16.gmra.mxu0 %v1378
    %v1504 = vpop.f32.mrf.mxu0
    %v1505 = vadd.f32 %v1383, %v1504
    %v1506 = vpop.f32.mrf.mxu0
    %v1507 = vadd.f32 %v1387, %v1506
    %v1508 = vpop.f32.mrf.mxu0
    %v1509 = vpop.f32.mrf.mxu0
    %1510 = vdwg.mxu0
    %v1511 = vtanh.pop %v1505
    %v1512 = vtanh.pop %v1507
    %v1513 = vld [vmem:[#allocation10] sm:$0xff]
    %v1514 = vld [vmem:[#allocation10 + $0x8] sm:$0xff]
    %v1515 = vld [vmem:[#allocation10 + $0x10] sm:$0xff]
    %v1516 = vld [vmem:[#allocation10 + $0x18] sm:$0xff]
    %v1517 = vld [vmem:[#allocation10 + $0x20] sm:$0xff]
    %v1518 = vld [vmem:[#allocation10 + $0x28] sm:$0xff]
    %v1519 = vld [vmem:[#allocation10 + $0x30] sm:$0xff]
    %v1520 = vld [vmem:[#allocation10 + $0x38] sm:$0xff]
    %v1521 = vld [vmem:[#allocation10 + $0x40] sm:$0xff]
    %v1522 = vld [vmem:[#allocation10 + $0x48] sm:$0xff]
    %v1523 = vld [vmem:[#allocation10 + $0x50] sm:$0xff]
    %v1524 = vld [vmem:[#allocation10 + $0x58] sm:$0xff]
    %v1525 = vld [vmem:[#allocation10 + $0x60] sm:$0xff]
    %v1526 = vld [vmem:[#allocation10 + $0x68] sm:$0xff]
    %v1527 = vld [vmem:[#allocation10 + $0x70] sm:$0xff]
    %v1528 = vld [vmem:[#allocation10 + $0x78] sm:$0xff]
    %v1529 = vld [vmem:[#allocation10 + $0x80] sm:$0xff]
    %v1530 = vld [vmem:[#allocation10 + $0x88] sm:$0xff]
    %v1531 = vld [vmem:[#allocation10 + $0x90] sm:$0xff]
    %v1532 = vld [vmem:[#allocation10 + $0x98] sm:$0xff]
    %v1533 = vld [vmem:[#allocation10 + $0xa0] sm:$0xff]
    %v1534 = vld [vmem:[#allocation10 + $0xa8] sm:$0xff]
    %v1535 = vld [vmem:[#allocation10 + $0xb0] sm:$0xff]
    %v1536 = vld [vmem:[#allocation10 + $0xb8] sm:$0xff]
    %v1537 = vld [vmem:[#allocation10 + $0xc0] sm:$0xff]
    %v1538 = vld [vmem:[#allocation10 + $0xc8] sm:$0xff]
    %v1539 = vld [vmem:[#allocation10 + $0xd0] sm:$0xff]
    %v1540 = vld [vmem:[#allocation10 + $0xd8] sm:$0xff]
    %v1541 = vld [vmem:[#allocation10 + $0xe0] sm:$0xff]
    %v1542 = vld [vmem:[#allocation10 + $0xe8] sm:$0xff]
    %v1543 = vld [vmem:[#allocation10 + $0xf0] sm:$0xff]
    %v1544 = vld [vmem:[#allocation10 + $0xf8] sm:$0xff]
    %v1545 = vld [vmem:[#allocation10 + $0x100] sm:$0xff]
    %v1546 = vld [vmem:[#allocation10 + $0x108] sm:$0xff]
    %v1547 = vld [vmem:[#allocation10 + $0x110] sm:$0xff]
    %v1548 = vld [vmem:[#allocation10 + $0x118] sm:$0xff]
    %v1549 = vld [vmem:[#allocation10 + $0x120] sm:$0xff]
    %v1550 = vld [vmem:[#allocation10 + $0x128] sm:$0xff]
    %v1551 = vld [vmem:[#allocation10 + $0x130] sm:$0xff]
    %v1552 = vld [vmem:[#allocation10 + $0x138] sm:$0xff]
    %v1553 = vld [vmem:[#allocation10 + $0x140] sm:$0xff]
    %v1554 = vld [vmem:[#allocation10 + $0x148] sm:$0xff]
    %v1555 = vld [vmem:[#allocation10 + $0x150] sm:$0xff]
    %v1556 = vld [vmem:[#allocation10 + $0x158] sm:$0xff]
    %v1557 = vld [vmem:[#allocation10 + $0x160] sm:$0xff]
    %v1558 = vld [vmem:[#allocation10 + $0x168] sm:$0xff]
    %v1559 = vld [vmem:[#allocation10 + $0x170] sm:$0xff]
    %v1560 = vld [vmem:[#allocation10 + $0x178] sm:$0xff]
    %v1561 = vld [vmem:[#allocation10 + $0x180] sm:$0xff]
    %v1562 = vld [vmem:[#allocation10 + $0x188] sm:$0xff]
    %v1563 = vld [vmem:[#allocation10 + $0x190] sm:$0xff]
    %v1564 = vld [vmem:[#allocation10 + $0x198] sm:$0xff]
    %v1565 = vld [vmem:[#allocation10 + $0x1a0] sm:$0xff]
    %v1566 = vld [vmem:[#allocation10 + $0x1a8] sm:$0xff]
    %v1567 = vld [vmem:[#allocation10 + $0x1b0] sm:$0xff]
    %v1568 = vld [vmem:[#allocation10 + $0x1b8] sm:$0xff]
    %v1569 = vld [vmem:[#allocation10 + $0x1c0] sm:$0xff]
    %v1570 = vld [vmem:[#allocation10 + $0x1c8] sm:$0xff]
    %v1571 = vld [vmem:[#allocation10 + $0x1d0] sm:$0xff]
    %v1572 = vld [vmem:[#allocation10 + $0x1d8] sm:$0xff]
    %v1573 = vld [vmem:[#allocation10 + $0x1e0] sm:$0xff]
    %v1574 = vld [vmem:[#allocation10 + $0x1e8] sm:$0xff]
    %v1575 = vld [vmem:[#allocation10 + $0x1f0] sm:$0xff]
    %v1576 = vld [vmem:[#allocation10 + $0x1f8] sm:$0xff]
    %v1577 = vld [vmem:[#allocation10 + $0x200] sm:$0xff]
    %v1578 = vld [vmem:[#allocation10 + $0x208] sm:$0xff]
    %v1579 = vld [vmem:[#allocation10 + $0x210] sm:$0xff]
    %v1580 = vld [vmem:[#allocation10 + $0x218] sm:$0xff]
    %v1581 = vld [vmem:[#allocation10 + $0x220] sm:$0xff]
    %v1582 = vld [vmem:[#allocation10 + $0x228] sm:$0xff]
    %v1583 = vld [vmem:[#allocation10 + $0x230] sm:$0xff]
    %v1584 = vld [vmem:[#allocation10 + $0x238] sm:$0xff]
    %v1585 = vld [vmem:[#allocation10 + $0x240] sm:$0xff]
    %v1586 = vld [vmem:[#allocation10 + $0x248] sm:$0xff]
    %v1587 = vld [vmem:[#allocation10 + $0x250] sm:$0xff]
    %v1588 = vld [vmem:[#allocation10 + $0x258] sm:$0xff]
    %v1589 = vld [vmem:[#allocation10 + $0x260] sm:$0xff]
    %v1590 = vld [vmem:[#allocation10 + $0x268] sm:$0xff]
    %v1591 = vld [vmem:[#allocation10 + $0x270] sm:$0xff]
    %v1592 = vld [vmem:[#allocation10 + $0x278] sm:$0xff]
    %v1593 = vld [vmem:[#allocation10 + $0x280] sm:$0xff]
    %v1594 = vld [vmem:[#allocation10 + $0x288] sm:$0xff]
    %v1595 = vld [vmem:[#allocation10 + $0x290] sm:$0xff]
    %v1596 = vld [vmem:[#allocation10 + $0x298] sm:$0xff]
    %v1597 = vld [vmem:[#allocation10 + $0x2a0] sm:$0xff]
    %v1598 = vld [vmem:[#allocation10 + $0x2a8] sm:$0xff]
    %v1599 = vld [vmem:[#allocation10 + $0x2b0] sm:$0xff]
    %v1600 = vld [vmem:[#allocation10 + $0x2b8] sm:$0xff]
    %v1601 = vld [vmem:[#allocation10 + $0x2c0] sm:$0xff]
    %v1602 = vld [vmem:[#allocation10 + $0x2c8] sm:$0xff]
    %v1603 = vld [vmem:[#allocation10 + $0x2d0] sm:$0xff]
    %v1604 = vld [vmem:[#allocation10 + $0x2d8] sm:$0xff]
    %v1605 = vld [vmem:[#allocation10 + $0x2e0] sm:$0xff]
    %v1606 = vld [vmem:[#allocation10 + $0x2e8] sm:$0xff]
    %v1607 = vld [vmem:[#allocation10 + $0x2f0] sm:$0xff]
    %v1608 = vld [vmem:[#allocation10 + $0x2f8] sm:$0xff]
    %s1609 = scalar_lea.vmem [#allocation11], 7
    %v1610 = vld [vmem:[%s1609] ss:$8 sm:$0xf]
    %v1611 = vld [vmem:[%s1609] ss:$8 sm:$0x30]
    %v1612 = vor.u32 %v1610, %v1611
    %v1613 = vpack.c.bf16 %v1511, %v1511
    %v1614 = vpack.c.bf16 %v1512, %v1512
    %v1616 = vlaneseq
    %v1617 = vshrl.u32 %v1616, 7
    %v1618 = vsub.s32 0, %v1617
    %v1619 = vrot.slane %v1612, %v1618
    %v1620 = vlaneseq
    %v1621 = vshrl.u32 %v1620, 7
    %v1622 = vsub.s32 1, %v1621
    %v1623 = vrot.slane %v1612, %v1622
    %v1624 = vlaneseq
    %v1625 = vshrl.u32 %v1624, 7
    %v1626 = vsub.s32 2, %v1625
    %v1627 = vrot.slane %v1612, %v1626
    %v1628 = vlaneseq
    %v1629 = vshrl.u32 %v1628, 7
    %v1630 = vsub.s32 3, %v1629
    %v1631 = vrot.slane %v1612, %v1630
    %v1632 = vlaneseq
    %v1633 = vshrl.u32 %v1632, 7
    %v1634 = vsub.s32 4, %v1633
    %v1635 = vrot.slane %v1612, %v1634
    %v1636 = vlaneseq
    %v1637 = vshrl.u32 %v1636, 7
    %v1638 = vsub.s32 5, %v1637
    %v1639 = vrot.slane %v1612, %v1638
    %v1742 = vunpack.c.l.b16 %v1513
    %v1743 = vunpack.c.h.b16 %v1513
    %v1744 = vunpack.c.l.b16 %v1514
    %v1745 = vunpack.c.h.b16 %v1514
    %v1746 = vunpack.c.l.b16 %v1515
    %v1747 = vunpack.c.h.b16 %v1515
    %v1748 = vunpack.c.l.b16 %v1516
    %v1749 = vunpack.c.h.b16 %v1516
    %v1750 = vunpack.c.l.b16 %v1517
    %v1751 = vunpack.c.h.b16 %v1517
    %v1752 = vunpack.c.l.b16 %v1518
    %v1753 = vunpack.c.h.b16 %v1518
    %v1754 = vunpack.c.l.b16 %v1519
    %v1755 = vunpack.c.h.b16 %v1519
    %v1756 = vunpack.c.l.b16 %v1520
    %v1757 = vunpack.c.h.b16 %v1520
    %v1758 = vunpack.c.l.b16 %v1521
    %v1759 = vunpack.c.h.b16 %v1521
    %v1760 = vunpack.c.l.b16 %v1522
    %v1761 = vunpack.c.h.b16 %v1522
    %v1762 = vunpack.c.l.b16 %v1523
    %v1763 = vunpack.c.h.b16 %v1523
    %v1764 = vunpack.c.l.b16 %v1524
    %v1765 = vunpack.c.h.b16 %v1524
    %v1766 = vunpack.c.l.b16 %v1525
    %v1767 = vunpack.c.h.b16 %v1525
    %v1768 = vunpack.c.l.b16 %v1526
    %v1769 = vunpack.c.h.b16 %v1526
    %v1770 = vunpack.c.l.b16 %v1527
    %v1771 = vunpack.c.h.b16 %v1527
    %v1772 = vunpack.c.l.b16 %v1528
    %v1773 = vunpack.c.h.b16 %v1528
    %v1774 = vunpack.c.l.b16 %v1529
    %v1775 = vunpack.c.h.b16 %v1529
    %v1776 = vunpack.c.l.b16 %v1530
    %v1777 = vunpack.c.h.b16 %v1530
    %v1778 = vunpack.c.l.b16 %v1531
    %v1779 = vunpack.c.h.b16 %v1531
    %v1780 = vunpack.c.l.b16 %v1532
    %v1781 = vunpack.c.h.b16 %v1532
    %v1782 = vunpack.c.l.b16 %v1533
    %v1783 = vunpack.c.h.b16 %v1533
    %v1784 = vunpack.c.l.b16 %v1534
    %v1785 = vunpack.c.h.b16 %v1534
    %v1786 = vunpack.c.l.b16 %v1535
    %v1787 = vunpack.c.h.b16 %v1535
    %v1788 = vunpack.c.l.b16 %v1536
    %v1789 = vunpack.c.h.b16 %v1536
    %v1790 = vunpack.c.l.b16 %v1537
    %v1791 = vunpack.c.h.b16 %v1537
    %v1792 = vunpack.c.l.b16 %v1538
    %v1793 = vunpack.c.h.b16 %v1538
    %v1794 = vunpack.c.l.b16 %v1539
    %v1795 = vunpack.c.h.b16 %v1539
    %v1796 = vunpack.c.l.b16 %v1540
    %v1797 = vunpack.c.h.b16 %v1540
    %v1798 = vunpack.c.l.b16 %v1541
    %v1799 = vunpack.c.h.b16 %v1541
    %v1800 = vunpack.c.l.b16 %v1542
    %v1801 = vunpack.c.h.b16 %v1542
    %v1802 = vunpack.c.l.b16 %v1543
    %v1803 = vunpack.c.h.b16 %v1543
    %v1804 = vunpack.c.l.b16 %v1544
    %v1805 = vunpack.c.h.b16 %v1544
    %v1806 = vunpack.c.l.b16 %v1545
    %v1807 = vunpack.c.h.b16 %v1545
    %v1808 = vunpack.c.l.b16 %v1546
    %v1809 = vunpack.c.h.b16 %v1546
    %v1810 = vunpack.c.l.b16 %v1547
    %v1811 = vunpack.c.h.b16 %v1547
    %v1812 = vunpack.c.l.b16 %v1548
    %v1813 = vunpack.c.h.b16 %v1548
    %v1814 = vunpack.c.l.b16 %v1549
    %v1815 = vunpack.c.h.b16 %v1549
    %v1816 = vunpack.c.l.b16 %v1550
    %v1817 = vunpack.c.h.b16 %v1550
    %v1818 = vunpack.c.l.b16 %v1551
    %v1819 = vunpack.c.h.b16 %v1551
    %v1820 = vunpack.c.l.b16 %v1552
    %v1821 = vunpack.c.h.b16 %v1552
    %v1822 = vunpack.c.l.b16 %v1553
    %v1823 = vunpack.c.h.b16 %v1553
    %v1824 = vunpack.c.l.b16 %v1554
    %v1825 = vunpack.c.h.b16 %v1554
    %v1826 = vunpack.c.l.b16 %v1555
    %v1827 = vunpack.c.h.b16 %v1555
    %v1828 = vunpack.c.l.b16 %v1556
    %v1829 = vunpack.c.h.b16 %v1556
    %v1830 = vunpack.c.l.b16 %v1557
    %v1831 = vunpack.c.h.b16 %v1557
    %v1832 = vunpack.c.l.b16 %v1558
    %v1833 = vunpack.c.h.b16 %v1558
    %v1834 = vunpack.c.l.b16 %v1559
    %v1835 = vunpack.c.h.b16 %v1559
    %v1836 = vunpack.c.l.b16 %v1560
    %v1837 = vunpack.c.h.b16 %v1560
    %v1838 = vunpack.c.l.b16 %v1561
    %v1839 = vunpack.c.h.b16 %v1561
    %v1840 = vunpack.c.l.b16 %v1562
    %v1841 = vunpack.c.h.b16 %v1562
    %v1842 = vunpack.c.l.b16 %v1563
    %v1843 = vunpack.c.h.b16 %v1563
    %v1844 = vunpack.c.l.b16 %v1564
    %v1845 = vunpack.c.h.b16 %v1564
    %v1846 = vunpack.c.l.b16 %v1565
    %v1847 = vunpack.c.h.b16 %v1565
    %v1848 = vunpack.c.l.b16 %v1566
    %v1849 = vunpack.c.h.b16 %v1566
    %v1850 = vunpack.c.l.b16 %v1567
    %v1851 = vunpack.c.h.b16 %v1567
    %v1852 = vunpack.c.l.b16 %v1568
    %v1853 = vunpack.c.h.b16 %v1568
    %v1854 = vunpack.c.l.b16 %v1569
    %v1855 = vunpack.c.h.b16 %v1569
    %v1856 = vunpack.c.l.b16 %v1570
    %v1857 = vunpack.c.h.b16 %v1570
    %v1858 = vunpack.c.l.b16 %v1571
    %v1859 = vunpack.c.h.b16 %v1571
    %v1860 = vunpack.c.l.b16 %v1572
    %v1861 = vunpack.c.h.b16 %v1572
    %v1862 = vunpack.c.l.b16 %v1573
    %v1863 = vunpack.c.h.b16 %v1573
    %v1864 = vunpack.c.l.b16 %v1574
    %v1865 = vunpack.c.h.b16 %v1574
    %v1866 = vunpack.c.l.b16 %v1575
    %v1867 = vunpack.c.h.b16 %v1575
    %v1868 = vunpack.c.l.b16 %v1576
    %v1869 = vunpack.c.h.b16 %v1576
    %v1870 = vunpack.c.l.b16 %v1577
    %v1871 = vunpack.c.h.b16 %v1577
    %v1872 = vunpack.c.l.b16 %v1578
    %v1873 = vunpack.c.h.b16 %v1578
    %v1874 = vunpack.c.l.b16 %v1579
    %v1875 = vunpack.c.h.b16 %v1579
    %v1876 = vunpack.c.l.b16 %v1580
    %v1877 = vunpack.c.h.b16 %v1580
    %v1878 = vunpack.c.l.b16 %v1581
    %v1879 = vunpack.c.h.b16 %v1581
    %v1880 = vunpack.c.l.b16 %v1582
    %v1881 = vunpack.c.h.b16 %v1582
    %v1882 = vunpack.c.l.b16 %v1583
    %v1883 = vunpack.c.h.b16 %v1583
    %v1884 = vunpack.c.l.b16 %v1584
    %v1885 = vunpack.c.h.b16 %v1584
    %v1886 = vunpack.c.l.b16 %v1585
    %v1887 = vunpack.c.h.b16 %v1585
    %v1888 = vunpack.c.l.b16 %v1586
    %v1889 = vunpack.c.h.b16 %v1586
    %v1890 = vunpack.c.l.b16 %v1587
    %v1891 = vunpack.c.h.b16 %v1587
    %v1892 = vunpack.c.l.b16 %v1588
    %v1893 = vunpack.c.h.b16 %v1588
    %v1894 = vunpack.c.l.b16 %v1589
    %v1895 = vunpack.c.h.b16 %v1589
    %v1896 = vunpack.c.l.b16 %v1590
    %v1897 = vunpack.c.h.b16 %v1590
    %v1898 = vunpack.c.l.b16 %v1591
    %v1899 = vunpack.c.h.b16 %v1591
    %v1900 = vunpack.c.l.b16 %v1592
    %v1901 = vunpack.c.h.b16 %v1592
    %v1902 = vunpack.c.l.b16 %v1593
    %v1903 = vunpack.c.h.b16 %v1593
    %v1904 = vunpack.c.l.b16 %v1594
    %v1905 = vunpack.c.h.b16 %v1594
    %v1906 = vunpack.c.l.b16 %v1595
    %v1907 = vunpack.c.h.b16 %v1595
    %v1908 = vunpack.c.l.b16 %v1596
    %v1909 = vunpack.c.h.b16 %v1596
    %v1910 = vunpack.c.l.b16 %v1597
    %v1911 = vunpack.c.h.b16 %v1597
    %v1912 = vunpack.c.l.b16 %v1598
    %v1913 = vunpack.c.h.b16 %v1598
    %v1914 = vunpack.c.l.b16 %v1599
    %v1915 = vunpack.c.h.b16 %v1599
    %v1916 = vunpack.c.l.b16 %v1600
    %v1917 = vunpack.c.h.b16 %v1600
    %v1918 = vunpack.c.l.b16 %v1601
    %v1919 = vunpack.c.h.b16 %v1601
    %v1920 = vunpack.c.l.b16 %v1602
    %v1921 = vunpack.c.h.b16 %v1602
    %v1922 = vunpack.c.l.b16 %v1603
    %v1923 = vunpack.c.h.b16 %v1603
    %v1924 = vunpack.c.l.b16 %v1604
    %v1925 = vunpack.c.h.b16 %v1604
    %v1926 = vunpack.c.l.b16 %v1605
    %v1927 = vunpack.c.h.b16 %v1605
    %v1928 = vunpack.c.l.b16 %v1606
    %v1929 = vunpack.c.h.b16 %v1606
    %v1930 = vunpack.c.l.b16 %v1607
    %v1931 = vunpack.c.h.b16 %v1607
    %v1932 = vunpack.c.l.b16 %v1608
    %v1933 = vunpack.c.h.b16 %v1608
    %v1934 = vpack.c.b16 %v1748, %v1742
    %v1935 = vpack.c.b16 %v1749, %v1743
    %v1936 = vpack.c.b16 %v1750, %v1744
    %v1937 = vpack.c.b16 %v1751, %v1745
    %v1938 = vpack.c.b16 %v1752, %v1746
    %v1939 = vpack.c.b16 %v1753, %v1747
    %v1940 = vpack.c.b16 %v1760, %v1754
    %v1941 = vpack.c.b16 %v1761, %v1755
    %v1942 = vpack.c.b16 %v1762, %v1756
    %v1943 = vpack.c.b16 %v1763, %v1757
    %v1944 = vpack.c.b16 %v1764, %v1758
    %v1945 = vpack.c.b16 %v1765, %v1759
    %v1946 = vpack.c.b16 %v1772, %v1766
    %v1947 = vpack.c.b16 %v1773, %v1767
    %v1948 = vpack.c.b16 %v1774, %v1768
    %v1949 = vpack.c.b16 %v1775, %v1769
    %v1950 = vpack.c.b16 %v1776, %v1770
    %v1951 = vpack.c.b16 %v1777, %v1771
    %v1952 = vpack.c.b16 %v1784, %v1778
    %v1953 = vpack.c.b16 %v1785, %v1779
    %v1954 = vpack.c.b16 %v1786, %v1780
    %v1955 = vpack.c.b16 %v1787, %v1781
    %v1956 = vpack.c.b16 %v1788, %v1782
    %v1957 = vpack.c.b16 %v1789, %v1783
    %v1958 = vpack.c.b16 %v1796, %v1790
    %v1959 = vpack.c.b16 %v1797, %v1791
    %v1960 = vpack.c.b16 %v1798, %v1792
    %v1961 = vpack.c.b16 %v1799, %v1793
    %v1962 = vpack.c.b16 %v1800, %v1794
    %v1963 = vpack.c.b16 %v1801, %v1795
    %v1964 = vpack.c.b16 %v1808, %v1802
    %v1965 = vpack.c.b16 %v1809, %v1803
    %v1966 = vpack.c.b16 %v1810, %v1804
    %v1967 = vpack.c.b16 %v1811, %v1805
    %v1968 = vpack.c.b16 %v1812, %v1806
    %v1969 = vpack.c.b16 %v1813, %v1807
    %v1970 = vpack.c.b16 %v1820, %v1814
    %v1971 = vpack.c.b16 %v1821, %v1815
    %v1972 = vpack.c.b16 %v1822, %v1816
    %v1973 = vpack.c.b16 %v1823, %v1817
    %v1974 = vpack.c.b16 %v1824, %v1818
    %v1975 = vpack.c.b16 %v1825, %v1819
    %v1976 = vpack.c.b16 %v1832, %v1826
    %v1977 = vpack.c.b16 %v1833, %v1827
    %v1978 = vpack.c.b16 %v1834, %v1828
    %v1979 = vpack.c.b16 %v1835, %v1829
    %v1980 = vpack.c.b16 %v1836, %v1830
    %v1981 = vpack.c.b16 %v1837, %v1831
    %v1982 = vpack.c.b16 %v1844, %v1838
    %v1983 = vpack.c.b16 %v1845, %v1839
    %v1984 = vpack.c.b16 %v1846, %v1840
    %v1985 = vpack.c.b16 %v1847, %v1841
    %v1986 = vpack.c.b16 %v1848, %v1842
    %v1987 = vpack.c.b16 %v1849, %v1843
    %v1988 = vpack.c.b16 %v1856, %v1850
    %v1989 = vpack.c.b16 %v1857, %v1851
    %v1990 = vpack.c.b16 %v1858, %v1852
    %v1991 = vpack.c.b16 %v1859, %v1853
    %v1992 = vpack.c.b16 %v1860, %v1854
    %v1993 = vpack.c.b16 %v1861, %v1855
    %v1994 = vpack.c.b16 %v1868, %v1862
    %v1995 = vpack.c.b16 %v1869, %v1863
    %v1996 = vpack.c.b16 %v1870, %v1864
    %v1997 = vpack.c.b16 %v1871, %v1865
    %v1998 = vpack.c.b16 %v1872, %v1866
    %v1999 = vpack.c.b16 %v1873, %v1867
    %v2000 = vpack.c.b16 %v1880, %v1874
    %v2001 = vpack.c.b16 %v1881, %v1875
    %v2002 = vpack.c.b16 %v1882, %v1876
    %v2003 = vpack.c.b16 %v1883, %v1877
    %v2004 = vpack.c.b16 %v1884, %v1878
    %v2005 = vpack.c.b16 %v1885, %v1879
    %v2006 = vpack.c.b16 %v1892, %v1886
    %v2007 = vpack.c.b16 %v1893, %v1887
    %v2008 = vpack.c.b16 %v1894, %v1888
    %v2009 = vpack.c.b16 %v1895, %v1889
    %v2010 = vpack.c.b16 %v1896, %v1890
    %v2011 = vpack.c.b16 %v1897, %v1891
    %v2012 = vpack.c.b16 %v1904, %v1898
    %v2013 = vpack.c.b16 %v1905, %v1899
    %v2014 = vpack.c.b16 %v1906, %v1900
    %v2015 = vpack.c.b16 %v1907, %v1901
    %v2016 = vpack.c.b16 %v1908, %v1902
    %v2017 = vpack.c.b16 %v1909, %v1903
    %v2018 = vpack.c.b16 %v1916, %v1910
    %v2019 = vpack.c.b16 %v1917, %v1911
    %v2020 = vpack.c.b16 %v1918, %v1912
    %v2021 = vpack.c.b16 %v1919, %v1913
    %v2022 = vpack.c.b16 %v1920, %v1914
    %v2023 = vpack.c.b16 %v1921, %v1915
    %v2024 = vpack.c.b16 %v1928, %v1922
    %v2025 = vpack.c.b16 %v1929, %v1923
    %v2026 = vpack.c.b16 %v1930, %v1924
    %v2027 = vpack.c.b16 %v1931, %v1925
    %v2028 = vpack.c.b16 %v1932, %v1926
    %v2029 = vpack.c.b16 %v1933, %v1927
    %2126 = vmatprep.subr.bf16.mxu0 %v1977
    %2127 = vmatpush1.bf16.msra.mxu0 %v1976
    %2128 = vmatprep.subr.bf16.mxu0 %v1971
    %2129 = vmatpush1.bf16.msra.mxu0 %v1970
    %2130 = vmatprep.subr.bf16.mxu0 %v1965
    %2131 = vmatpush1.bf16.msra.mxu0 %v1964
    %2132 = vmatprep.subr.bf16.mxu0 %v1959
    %2133 = vmatpush1.bf16.msra.mxu0 %v1958
    %2134 = vmatprep.subr.bf16.mxu0 %v1953
    %2135 = vmatpush1.bf16.msra.mxu0 %v1952
    %2136 = vmatprep.subr.bf16.mxu0 %v1947
    %2137 = vmatpush1.bf16.msra.mxu0 %v1946
    %2138 = vmatprep.subr.bf16.mxu0 %v1941
    %2139 = vmatpush1.bf16.msra.mxu0 %v1940
    %2140 = vmatprep.subr.bf16.mxu0 %v1935
    %2141 = vmatpush1.bf16.msra.mxu0 %v1934
    %2142 = vmatprep.subr.bf16.mxu0 %v2025
    %2143 = vmatpush2.bf16.msra.mxu0 %v2024
    %2144 = vmatprep.subr.bf16.mxu0 %v2019
    %2145 = vmatpush2.bf16.msra.mxu0 %v2018
    %2146 = vmatprep.subr.bf16.mxu0 %v2013
    %2147 = vmatpush2.bf16.msra.mxu0 %v2012
    %2148 = vmatprep.subr.bf16.mxu0 %v2007
    %2149 = vmatpush2.bf16.msra.mxu0 %v2006
    %2150 = vmatprep.subr.bf16.mxu0 %v2001
    %2151 = vmatpush2.bf16.msra.mxu0 %v2000
    %2152 = vmatprep.subr.bf16.mxu0 %v1995
    %2153 = vmatpush2.bf16.msra.mxu0 %v1994
    %2154 = vmatprep.subr.bf16.mxu0 %v1989
    %2155 = vmatpush2.bf16.msra.mxu0 %v1988
    %2156 = vmatprep.subr.bf16.mxu0 %v1983
    %2157 = vmatpush2.bf16.msra.mxu0 %v1982
    %2158 = vmatprep.mubr.bf16.mxu0 %v1614
    %2159 = vmatmul.mubr.bf16.gmra.mxu0 %v1613
    %v2160 = vpop.f32.mrf.mxu0
    %v2161 = vadd.f32 %v1619, %v2160
    %v2162 = vpop.f32.mrf.mxu0
    %v2163 = vadd.f32 %v1623, %v2162
    %v2164 = vpop.f32.mrf.mxu0
    %v2165 = vpop.f32.mrf.mxu0
    %2166 = vdwg.mxu0
    %2167 = vmatprep.subr.bf16.mxu0 %v1979
    %2168 = vmatpush1.bf16.msra.mxu0 %v1978
    %2169 = vmatprep.subr.bf16.mxu0 %v1973
    %2170 = vmatpush1.bf16.msra.mxu0 %v1972
    %2171 = vmatprep.subr.bf16.mxu0 %v1967
    %2172 = vmatpush1.bf16.msra.mxu0 %v1966
    %2173 = vmatprep.subr.bf16.mxu0 %v1961
    %2174 = vmatpush1.bf16.msra.mxu0 %v1960
    %2175 = vmatprep.subr.bf16.mxu0 %v1955
    %2176 = vmatpush1.bf16.msra.mxu0 %v1954
    %2177 = vmatprep.subr.bf16.mxu0 %v1949
    %2178 = vmatpush1.bf16.msra.mxu0 %v1948
    %2179 = vmatprep.subr.bf16.mxu0 %v1943
    %2180 = vmatpush1.bf16.msra.mxu0 %v1942
    %2181 = vmatprep.subr.bf16.mxu0 %v1937
    %2182 = vmatpush1.bf16.msra.mxu0 %v1936
    %2183 = vmatprep.subr.bf16.mxu0 %v2027
    %2184 = vmatpush2.bf16.msra.mxu0 %v2026
    %2185 = vmatprep.subr.bf16.mxu0 %v2021
    %2186 = vmatpush2.bf16.msra.mxu0 %v2020
    %2187 = vmatprep.subr.bf16.mxu0 %v2015
    %2188 = vmatpush2.bf16.msra.mxu0 %v2014
    %2189 = vmatprep.subr.bf16.mxu0 %v2009
    %2190 = vmatpush2.bf16.msra.mxu0 %v2008
    %2191 = vmatprep.subr.bf16.mxu0 %v2003
    %2192 = vmatpush2.bf16.msra.mxu0 %v2002
    %2193 = vmatprep.subr.bf16.mxu0 %v1997
    %2194 = vmatpush2.bf16.msra.mxu0 %v1996
    %2195 = vmatprep.subr.bf16.mxu0 %v1991
    %2196 = vmatpush2.bf16.msra.mxu0 %v1990
    %2197 = vmatprep.subr.bf16.mxu0 %v1985
    %2198 = vmatpush2.bf16.msra.mxu0 %v1984
    %2199 = vmatprep.mubr.bf16.mxu0 %v1614
    %2200 = vmatmul.mubr.bf16.gmra.mxu0 %v1613
    %v2201 = vpop.f32.mrf.mxu0
    %v2202 = vadd.f32 %v1627, %v2201
    %v2203 = vpop.f32.mrf.mxu0
    %v2204 = vadd.f32 %v1631, %v2203
    %v2205 = vpop.f32.mrf.mxu0
    %v2206 = vpop.f32.mrf.mxu0
    %2207 = vdwg.mxu0
    %2208 = vmatprep.subr.bf16.mxu0 %v1981
    %2209 = vmatpush1.bf16.msra.mxu0 %v1980
    %2210 = vmatprep.subr.bf16.mxu0 %v1975
    %2211 = vmatpush1.bf16.msra.mxu0 %v1974
    %2212 = vmatprep.subr.bf16.mxu0 %v1969
    %2213 = vmatpush1.bf16.msra.mxu0 %v1968
    %2214 = vmatprep.subr.bf16.mxu0 %v1963
    %2215 = vmatpush1.bf16.msra.mxu0 %v1962
    %2216 = vmatprep.subr.bf16.mxu0 %v1957
    %2217 = vmatpush1.bf16.msra.mxu0 %v1956
    %2218 = vmatprep.subr.bf16.mxu0 %v1951
    %2219 = vmatpush1.bf16.msra.mxu0 %v1950
    %2220 = vmatprep.subr.bf16.mxu0 %v1945
    %2221 = vmatpush1.bf16.msra.mxu0 %v1944
    %2222 = vmatprep.subr.bf16.mxu0 %v1939
    %2223 = vmatpush1.bf16.msra.mxu0 %v1938
    %2224 = vmatprep.subr.bf16.mxu0 %v2029
    %2225 = vmatpush2.bf16.msra.mxu0 %v2028
    %2226 = vmatprep.subr.bf16.mxu0 %v2023
    %2227 = vmatpush2.bf16.msra.mxu0 %v2022
    %2228 = vmatprep.subr.bf16.mxu0 %v2017
    %2229 = vmatpush2.bf16.msra.mxu0 %v2016
    %2230 = vmatprep.subr.bf16.mxu0 %v2011
    %2231 = vmatpush2.bf16.msra.mxu0 %v2010
    %2232 = vmatprep.subr.bf16.mxu0 %v2005
    %2233 = vmatpush2.bf16.msra.mxu0 %v2004
    %2234 = vmatprep.subr.bf16.mxu0 %v1999
    %2235 = vmatpush2.bf16.msra.mxu0 %v1998
    %2236 = vmatprep.subr.bf16.mxu0 %v1993
    %2237 = vmatpush2.bf16.msra.mxu0 %v1992
    %2238 = vmatprep.subr.bf16.mxu0 %v1987
    %2239 = vmatpush2.bf16.msra.mxu0 %v1986
    %2240 = vmatprep.mubr.bf16.mxu0 %v1614
    %2241 = vmatmul.mubr.bf16.gmra.mxu0 %v1613
    %v2242 = vpop.f32.mrf.mxu0
    %v2243 = vadd.f32 %v1635, %v2242
    %v2244 = vpop.f32.mrf.mxu0
    %v2245 = vadd.f32 %v1639, %v2244
    %v2246 = vpop.f32.mrf.mxu0
    %v2247 = vpop.f32.mrf.mxu0
    %2248 = vdwg.mxu0
    %2249 = vst [vmem:[#allocation13] sm:$0xff] %v2161
    %2250 = vst [vmem:[#allocation13 + $0x8] sm:$0xff] %v2163
    %2251 = vst [vmem:[#allocation13 + $0x10] sm:$0xff] %v2202
    %2252 = vst [vmem:[#allocation13 + $0x18] sm:$0xff] %v2204
    %2253 = vst [vmem:[#allocation13 + $0x20] sm:$0xff] %v2243
    %2254 = vst [vmem:[#allocation13 + $0x28] sm:$0xff] %v2245
    %v2255 = vmul.f32 %v120, %v120
    %v2256 = vmul.f32 %v121, %v121
    %v2257 = vmul.f32 %v122, %v122
    %v2258 = vmul.f32 %v123, %v123
    %v2259 = vmul.f32 %v124, %v124
    %v2260 = vmul.f32 %v125, %v125
    %v2261 = vadd.f32 %v2255, %v2256
    %v2262 = vadd.f32 %v2261, %v2257
    %v2263 = vadd.f32 %v2262, %v2258
    %v2264 = vadd.f32 %v2263, %v2259
    %v2265 = vadd.f32 %v2264, %v2260
    %2266 = vadd.xlane.f32.xlu0 %v2265
    %v2267 = vpop.xlane.xlu0 %2266
    %v2268 = vmul.f32 %v2161, %v2161
    %v2269 = vmul.f32 %v2163, %v2163
    %v2270 = vmul.f32 %v2202, %v2202
    %v2271 = vmul.f32 %v2204, %v2204
    %v2272 = vmul.f32 %v2243, %v2243
    %v2273 = vmul.f32 %v2245, %v2245
    %v2274 = vadd.f32 %v2268, %v2269
    %v2275 = vadd.f32 %v2274, %v2270
    %v2276 = vadd.f32 %v2275, %v2271
    %v2277 = vadd.f32 %v2276, %v2272
    %v2278 = vadd.f32 %v2277, %v2273
    %2279 = vadd.xlane.f32.xlu0 %v2278
    %v2280 = vpop.xlane.xlu0 %2279
    %v2281 = vmul.f32 %v120, %v2161
    %v2282 = vmul.f32 %v121, %v2163
    %v2283 = vmul.f32 %v122, %v2202
    %v2284 = vmul.f32 %v123, %v2204
    %v2285 = vmul.f32 %v124, %v2243
    %v2286 = vmul.f32 %v125, %v2245
    %v2287 = vadd.f32 %v2281, %v2282
    %v2288 = vadd.f32 %v2287, %v2283
    %v2289 = vadd.f32 %v2288, %v2284
    %v2290 = vadd.f32 %v2289, %v2285
    %v2291 = vadd.f32 %v2290, %v2286
    %2292 = vadd.xlane.f32.xlu0 %v2291
    %v2293 = vpop.xlane.xlu0 %2292
    %v2294 = vrsqrt.pop %v2267
    %v2295 = vmul.f32 %v2267, %v2294
    %vm2296 = vcmp.eq.f32.partialorder %v2267, inf
    %v2297 = vsel %vm2296, %v2267, %v2295
    %vm2298 = vcmp.eq.f32.partialorder %v2267, 0.0
    %v2299 = vand.u32 %v2267, 2147483648
    %v2300 = vsel %vm2298, %v2299, %v2297
    %v2301 = vrsqrt.pop %v2280
    %v2302 = vmul.f32 %v2280, %v2301
    %vm2303 = vcmp.eq.f32.partialorder %v2280, inf
    %v2304 = vsel %vm2303, %v2280, %v2302
    %vm2305 = vcmp.eq.f32.partialorder %v2280, 0.0
    %v2306 = vand.u32 %v2280, 2147483648
    %v2307 = vsel %vm2305, %v2306, %v2304
    %v2308 = vmax.f32 %v2300, 1e-08
    %v2309 = vmax.f32 %v2307, 1e-08
    %v2310 = vmul.f32 %v2308, %v2309
    %v2311 = vrcp.pop %v2310
    %v2312 = vmul.f32 %v2293, %v2311
    %v2313 = vmul.f32 %v2293, 2.0
    %v2314 = vsub.f32 %v2267, %v2313
    %v2315 = vadd.f32 %v2314, %v2280
    %v2316 = vmax.f32 %v2315, 0.0
    %v2317 = vrsqrt.pop %v2316
    %v2318 = vmul.f32 %v2316, %v2317
    %vm2319 = vcmp.eq.f32.partialorder %v2316, inf
    %v2320 = vsel %vm2319, %v2316, %v2318
    %vm2321 = vcmp.eq.f32.partialorder %v2316, 0.0
    %v2322 = vand.u32 %v2316, 2147483648
    %v2323 = vsel %vm2321, %v2322, %v2320
    %v2324 = vrcp.pop %v2300
    %v2325 = vmul.f32 %v2323, %v2324
    %v2326 = vld [vmem:[#allocation11 + $0x30] sm:$0xc0]
    %v2327 = vld [vmem:[#allocation11 + $0x60] sm:$0x1]
    %v2328 = vld [vmem:[#allocation11 + $0x34] ss:$0 sm:$0xff]
    %v2329 = vlaneseq
    %v2330 = vshrl.u32 %v2329, 7
    %v2331 = vsub.s32 6, %v2330
    %v2332 = vrot.slane %v2326, %v2331
    %v2333 = vmul.f32 %v1216, %v2332
    %v2334 = vadd.f32 %v2328, %v2333
    %v2335 = vlaneseq
    %v2336 = vshrl.u32 %v2335, 7
    %v2337 = vsub.s32 7, %v2336
    %v2338 = vrot.slane %v2326, %v2337
    %v2339 = vmul.f32 %v2325, %v2338
    %v2340 = vadd.f32 %v2334, %v2339
    %v2341 = vlaneseq
    %v2342 = vshrl.u32 %v2341, 7
    %v2343 = vsub.s32 0, %v2342
    %v2344 = vrot.slane %v2327, %v2343
    %v2345 = vmul.f32 %v2312, %v2344
    %v2346 = vadd.f32 %v2340, %v2345
    %v2347 = vtanh.pop %v2346
    %v2348 = vld [vmem:[#allocation11 + $0x60] sm:$0xfe]
    %v2349 = vld [vmem:[#allocation11 + $0x90] sm:$0x7]
    %v2350 = vld [vmem:[#allocation11 + $0x35] ss:$0 sm:$0xff]
    %vm2353 = vcmask 1046528
    %v2354 = vrot.slane %v2348, 1
    %v2355 = vrot.slane %v2349, 1
    %v2356 = vsel %vm2353, %v2354, %v2355
    %vm2358 = vcmask 80896
    %v2360 = vsel %vm2358, %v2347, 0
    %vm2362 = vcmask 1041408
    %v2363 = vsel %vm2362, %v2355, 0
    %2365 = vmatprep.subr.mxu0 0.0
    %2366 = vmatpush1.msra.mxu0 0.0
    %2367 = vmatprep.subr.mxu0 0.0
    %2368 = vmatpush1.msra.mxu0 0.0
    %2369 = vmatprep.subr.mxu0 0.0
    %2370 = vmatpush1.msra.mxu0 0.0
    %2371 = vmatprep.subr.mxu0 0.0
    %2372 = vmatpush1.msra.mxu0 0.0
    %2373 = vmatprep.subr.mxu0 0.0
    %2374 = vmatpush1.msra.mxu0 0.0
    %2375 = vmatprep.subr.mxu0 0.0
    %2376 = vmatpush1.msra.mxu0 0.0
    %2377 = vmatprep.subr.mxu0 0.0
    %2378 = vmatpush1.msra.mxu0 0.0
    %2379 = vmatprep.subr.mxu0 0.0
    %2380 = vmatpush1.msra.mxu0 0.0
    %2381 = vmatprep.subr.mxu0 0.0
    %2382 = vmatpush1.msra.mxu0 0.0
    %2383 = vmatprep.subr.mxu0 0.0
    %2384 = vmatpush1.msra.mxu0 0.0
    %2385 = vmatprep.subr.mxu0 0.0
    %2386 = vmatpush1.msra.mxu0 0.0
    %2387 = vmatprep.subr.mxu0 0.0
    %2388 = vmatpush1.msra.mxu0 0.0
    %2389 = vmatprep.subr.mxu0 0.0
    %2390 = vmatpush1.msra.mxu0 0.0
    %2391 = vmatprep.subr.mxu0 0.0
    %2392 = vmatpush1.msra.mxu0 0.0
    %2393 = vmatprep.subr.mxu0 0.0
    %2394 = vmatpush1.msra.mxu0 %v2363
    %2395 = vmatprep.subr.mxu0 0.0
    %2396 = vmatpush1.msra.mxu0 %v2356
    %2397 = vmatprep.subr.mxu0 0.0
    %2398 = vmatpush2.msra.mxu0 0.0
    %2399 = vmatprep.subr.mxu0 0.0
    %2400 = vmatpush2.msra.mxu0 0.0
    %2401 = vmatprep.subr.mxu0 0.0
    %2402 = vmatpush2.msra.mxu0 0.0
    %2403 = vmatprep.subr.mxu0 0.0
    %2404 = vmatpush2.msra.mxu0 0.0
    %2405 = vmatprep.subr.mxu0 0.0
    %2406 = vmatpush2.msra.mxu0 0.0
    %2407 = vmatprep.subr.mxu0 0.0
    %2408 = vmatpush2.msra.mxu0 0.0
    %2409 = vmatprep.subr.mxu0 0.0
    %2410 = vmatpush2.msra.mxu0 0.0
    %2411 = vmatprep.subr.mxu0 0.0
    %2412 = vmatpush2.msra.mxu0 0.0
    %2413 = vmatprep.subr.mxu0 0.0
    %2414 = vmatpush2.msra.mxu0 0.0
    %2415 = vmatprep.subr.mxu0 0.0
    %2416 = vmatpush2.msra.mxu0 0.0
    %2417 = vmatprep.subr.mxu0 0.0
    %2418 = vmatpush2.msra.mxu0 0.0
    %2419 = vmatprep.subr.mxu0 0.0
    %2420 = vmatpush2.msra.mxu0 0.0
    %2421 = vmatprep.subr.mxu0 0.0
    %2422 = vmatpush2.msra.mxu0 0.0
    %2423 = vmatprep.subr.mxu0 0.0
    %2424 = vmatpush2.msra.mxu0 0.0
    %2425 = vmatprep.subr.mxu0 0.0
    %2426 = vmatpush2.msra.mxu0 0.0
    %2427 = vmatprep.subr.mxu0 0.0
    %2428 = vmatpush2.msra.mxu0 0.0
    %2429 = vmatprep.mubr.f32.mxu0 0.0
    %2430 = vmatmul.mubr.f32.gmra.mxu0 %v2360
    %v2431 = vpop.f32.mrf.mxu0
    %v2432 = vadd.f32 %v2350, %v2431
    %v2433 = vpop.f32.mrf.mxu0
    %2434 = vdwg.mxu0
    %vm2435 = vcmask 15360
    %v2436 = vsel %vm2435, %v2432, -inf
    %2437 = vmax.xlane.f32.xlu0 %v2436
    %v2438 = vpop.xlane.xlu0 %2437
    %v2439 = vsub.f32 %v2432, %v2438
    %v2440 = vmul.f32 %v2439, 1.442695
    %v2441 = vpow.pop %v2440
    %v2442 = vsel %vm2435, %v2441, 0.0
    %2443 = vadd.xlane.f32.xlu0 %v2442
    %v2444 = vpop.xlane.xlu0 %2443
    %v2445 = vrcp.pop %v2444
    %v2446 = vmul.f32 %v2441, %v2445
    %2448 = vrot.lane.b32.xlu0 %v2446, 3
    %v2449 = vpop.permute.xlu0 %2448
    %vm2451 = vcmask 7168
    %v2452 = vsel %vm2451, %v1210, %v2325
    %v2453 = vsel %vm2435, %v2452, %v2312
    %vm2454 = vcmask 23552
    %v2455 = vsel %vm2454, %v2453, %v2449
    %vm2456 = vcmask 39936
    %v2457 = vsel %vm2456, %v2455, 0.0
    %2458 = vst [vmem:[#allocation14] sm:$0xff] %v2457
    // Predicated region
    $region66: #{tpu_custom_call.1} parent=1 // pred_check
      _
    $region67: #{tpu_custom_call.1} parent=1 // pred_check_branch
      %2460 = sbr.rel (0) target = $region69
    $region68: #{tpu_custom_call.1} parent=1 // pred_region
      %s2462 = ssub.s32 768, 768
      %2463 = vsyncadd [#allocation4], %s2462
      %s2465 = sshll.u32 [#allocation13], 4
      %s2466 = int_to_ptr.vmem [resolvable:$true] %s2465
      %2468 = dma.vmem_to_hbm [thread:$0]  %s2466, 768, %s10, [#allocation4]
    $region69: #{tpu_custom_call.1} parent=1 // pred_fallthru
      _
    // Predicated region
    $region70: #{tpu_custom_call.1} parent=1 // pred_check
      _
    $region71: #{tpu_custom_call.1} parent=1 // pred_check_branch
      %2470 = sbr.rel (0) target = $region73
    $region72: #{tpu_custom_call.1} parent=1 // pred_region
      %s2472 = ssub.s32 128, 128
      %2473 = vsyncadd [#allocation15], %s2472
      %s2475 = sshll.u32 [#allocation14], 4
      %s2476 = int_to_ptr.vmem [resolvable:$true] %s2475
      %2478 = dma.vmem_to_hbm [thread:$0]  %s2476, 128, %s11, [#allocation15]
    $region73: #{tpu_custom_call.1} parent=1 // pred_fallthru
      _
    // Predicated region
    $region74: #{tpu_custom_call.1} parent=1 // pred_check
      _
    $region75: #{tpu_custom_call.1} parent=1 // pred_check_branch
      %2480 = sbr.rel (0) target = $region77
    $region76: #{tpu_custom_call.1} parent=1 // pred_region
      %2481 = dma.done [#allocation4], 768
    $region77: #{tpu_custom_call.1} parent=1 // pred_fallthru
      _
    // Predicated region
    $region78: #{tpu_custom_call.1} parent=1 // pred_check
      _
    $region79: #{tpu_custom_call.1} parent=1 // pred_check_branch
      %2483 = sbr.rel (0) target = $region81
    $region80: #{tpu_custom_call.1} parent=1 // pred_region
      %2484 = dma.done [#allocation15], 128
    $region81: #{tpu_custom_call.1} parent=1 // pred_fallthru
      _
    %2485 = vsyncpa [#allocation3], 1
    %2486 = vsyncpa [#allocation6], 1
    %2487 = vsyncpa [#allocation9], 1
    %2488 = vsyncpa [#allocation12], 1
    %2489 = vsyncpa [#allocation4], 1
    %2490 = vsyncpa [#allocation15], 1

</llo_original>
